<compile_context>
chip_gen: v5e
topology: v5e:2x2
jax: 0.10.0
libtpu: 0.0.40
codegen_flags: <defaults>
</compile_context>

<pallas_src>
import functools

import jax
import jax.numpy as jnp
from jax.experimental import pallas as pl
from jax.experimental.pallas import tpu as pltpu


MULTI_PAD = 128   # classifier output padded to a full lane group


# ------------------------------ Fused kernel --------------------------------

def _bert_kernel(x_ref, mask_ref,
                 emb_g_ref, emb_b_ref,
                 qkv_w_ref, qkv_b_ref, o_w_ref, o_b_ref,
                 ln1_g_ref, ln1_b_ref,
                 ffn1_w_ref, ffn1_b_ref, ffn2_w_ref, ffn2_b_ref,
                 ln2_g_ref, ln2_b_ref,
                 pool_w_ref, pool_b_ref, cls_w_ref, cls_b_ref,
                 out_ref, ctx_ref,
                 *, num_layers, num_heads, head_dim, eps):
    """BB batch elements per grid step. x_ref: [BB,S,H]; out_ref: [BB,1,128]."""
    H = num_heads * head_dim
    BB, S, _ = x_ref.shape

    x = x_ref[...].astype(jnp.float32)                         # [BB, S, H]

    # Hoisted: additive attention bias broadcast ONCE per grid step.
    bias = jnp.broadcast_to(mask_ref[...].astype(jnp.float32), (BB, S, S))

    def layernorm(v, g, b):
        mean = jnp.mean(v, axis=-1, keepdims=True)
        var = jnp.mean((v - mean) ** 2, axis=-1, keepdims=True)
        return (v - mean) * jax.lax.rsqrt(var + eps) * g + b

    def dense(v, w, b):                                         # [BB,S,K] = v @ w + b
        return jax.lax.dot_general(v, w, (((2,), (0,)), ((), ())),
                                   preferred_element_type=jnp.float32) + b

    # Embedding LayerNorm (no residual).
    x = layernorm(x, emb_g_ref[...], emb_b_ref[...])

    # Static unroll: L=2 here. TODO(synk): use lax.fori_loop with dynamic
    # qkv_w_ref[l] indexing (and per-layer weight streaming) at real depths.
    for l in range(num_layers):
        # Fused QKV projection; Q weights/bias already carry 1/sqrt(head_dim).
        qkv = dense(x, qkv_w_ref[l], qkv_b_ref[l])              # [BB, S, 3H]
        q = qkv[:, :, 0:H]
        k = qkv[:, :, H:2 * H]
        v = qkv[:, :, 2 * H:3 * H]

        # Per-head attention; heads are contiguous lane slices. Context is
        # written straight into VMEM scratch (no concatenate).
        # TODO(synk): at real head counts batch heads into one dot_general.
        for h in range(num_heads):
            sl = slice(h * head_dim, (h + 1) * head_dim)
            qh, kh, vh = q[:, :, sl], k[:, :, sl], v[:, :, sl]
            s = jnp.einsum('bqd,bkd->bqk', qh, kh,
                           preferred_element_type=jnp.float32) + bias
            s_max = jnp.max(s, axis=-1, keepdims=True)
            e = jnp.exp(s - s_max)
            denom = jnp.sum(e, axis=-1, keepdims=True)
            p = e * pl.reciprocal(denom, approx=True)
            ctx_ref[:, :, sl] = jnp.einsum('bqk,bkd->bqd', p, vh,
                                           preferred_element_type=jnp.float32)

        attn_out = dense(ctx_ref[...], o_w_ref[l], o_b_ref[l])
        x = layernorm(x + attn_out, ln1_g_ref[l], ln1_b_ref[l])

        ffn = dense(x, ffn1_w_ref[l], ffn1_b_ref[l])
        # TODO(synk): PyTorch BERT gelu is the exact erf form; tanh approx used
        # here for guaranteed Mosaic lowering (tiny numerical difference).
        ffn = jax.nn.gelu(ffn)
        ffn = dense(ffn, ffn2_w_ref[l], ffn2_b_ref[l])
        x = layernorm(x + ffn, ln2_g_ref[l], ln2_b_ref[l])

    # Pooler: dense + tanh on the CLS (first) token of each batch element.
    cls = x[:, 0:1, :]                                          # [BB, 1, H]
    pooled = jnp.tanh(dense(cls, pool_w_ref[...], pool_b_ref[...]))
    # Dropout: eval mode -> identity.
    # TODO(synk): training-mode dropout (hidden_dropout_prob) via pltpu.prng_* omitted.

    # `multi` Linear(H,1) heads -> one [H, 128] lane-dense matmul (zero-padded).
    res = dense(pooled, cls_w_ref[...], cls_b_ref[...])         # [BB, 1, 128]
    out_ref[...] = res.astype(out_ref.dtype)


# ------------------------------- Parameters ---------------------------------

class Config:
    vocab_size = 100
    hidden_size = 32
    num_layers = 2
    num_heads = 2
    intermediate_size = 64
    max_position = 16
    type_vocab_size = 2
    hidden_dropout_prob = 0.1


def init_params(key, cfg, multi):
    """PyTorch-checkpoint-like parameter layout (per-layer dicts)."""
    H, I = cfg.hidden_size, cfg.intermediate_size
    keys = iter(jax.random.split(key, 64))

    def w(shape, scale=0.02):
        return (scale * jax.random.normal(next(keys), shape)).astype(jnp.float32)

    params = {
        "word_emb": w((cfg.vocab_size, H)),
        "pos_emb": w((cfg.max_position, H)),
        "type_emb": w((cfg.type_vocab_size, H)),
        "emb_ln_g": jnp.ones((H,), jnp.float32),
        "emb_ln_b": jnp.zeros((H,), jnp.float32),
        "layers": [],
        "pooler_w": w((H, H)),
        "pooler_b": jnp.zeros((H,), jnp.float32),
        # multi Linear(H, 1) heads concatenated -> weight [H, multi], bias [multi]
        "cls_w": w((H, multi)),
        "cls_b": jnp.zeros((multi,), jnp.float32),
    }
    for _ in range(cfg.num_layers):
        params["layers"].append({
            "q_w": w((H, H)), "q_b": jnp.zeros((H,), jnp.float32),
            "k_w": w((H, H)), "k_b": jnp.zeros((H,), jnp.float32),
            "v_w": w((H, H)), "v_b": jnp.zeros((H,), jnp.float32),
            "o_w": w((H, H)), "o_b": jnp.zeros((H,), jnp.float32),
            "ln1_g": jnp.ones((H,), jnp.float32),
            "ln1_b": jnp.zeros((H,), jnp.float32),
            "ffn1_w": w((H, I)), "ffn1_b": jnp.zeros((I,), jnp.float32),
            "ffn2_w": w((I, H)), "ffn2_b": jnp.zeros((H,), jnp.float32),
            "ln2_g": jnp.ones((H,), jnp.float32),
            "ln2_b": jnp.zeros((H,), jnp.float32),
        })
    return params


def prepare_params(params, cfg):
    """One-time preprocessing: fuse Q/K/V (with folded 1/sqrt(dH) scale),
    stack layers, pre-broadcast biases, lane-pad the classifier head."""
    H = cfg.hidden_size
    dH = H // cfg.num_heads
    scale = 1.0 / (dH ** 0.5)
    layers = params["layers"]

    def stack(name):
        return jnp.stack([lp[name] for lp in layers], axis=0)

    def row(name):                       # [L, N] -> [L, 1, N]
        return stack(name)[:, None, :]

    qkv_w = jnp.stack(
        [jnp.concatenate([lp["q_w"] * scale, lp["k_w"], lp["v_w"]], axis=1)
         for lp in layers], axis=0)                                  # [L, H, 3H]
    qkv_b = jnp.stack(
        [jnp.concatenate([lp["q_b"] * scale, lp["k_b"], lp["v_b"]])[None, :]
         for lp in layers], axis=0)                                  # [L, 1, 3H]

    multi = params["cls_w"].shape[1]
    cls_w_pad = jnp.zeros((H, MULTI_PAD), jnp.float32).at[:, :multi].set(params["cls_w"])
    cls_b_pad = jnp.zeros((1, MULTI_PAD), jnp.float32).at[0, :multi].set(params["cls_b"])

    return {
        "word_emb": params["word_emb"],
        "pos_emb": params["pos_emb"],
        "type_emb": params["type_emb"],
        "emb_ln_g": params["emb_ln_g"][None, :],
        "emb_ln_b": params["emb_ln_b"][None, :],
        "qkv_w": qkv_w, "qkv_b": qkv_b,
        "o_w": stack("o_w"), "o_b": row("o_b"),
        "ln1_g": row("ln1_g"), "ln1_b": row("ln1_b"),
        "ffn1_w": stack("ffn1_w"), "ffn1_b": row("ffn1_b"),
        "ffn2_w": stack("ffn2_w"), "ffn2_b": row("ffn2_b"),
        "ln2_g": row("ln2_g"), "ln2_b": row("ln2_b"),
        "pooler_w": params["pooler_w"], "pooler_b": params["pooler_b"][None, :],
        "cls_w": cls_w_pad, "cls_b": cls_b_pad,
    }


# ------------------------------ Forward pass ---------------------------------

_WEIGHT_NAMES = ("emb_ln_g", "emb_ln_b", "qkv_w", "qkv_b", "o_w", "o_b",
                 "ln1_g", "ln1_b", "ffn1_w", "ffn1_b", "ffn2_w", "ffn2_b",
                 "ln2_g", "ln2_b", "pooler_w", "pooler_b", "cls_w", "cls_b")


def big_model_forward(prep, cfg, multi, tokens, token_type_ids, attention_mask):
    B, S = tokens.shape
    H = cfg.hidden_size
    nH = cfg.num_heads
    dH = H // nH
    L = cfg.num_layers
    I = cfg.intermediate_size

    # Batch block: several batch elements per grid step (amortize per-step
    # overhead, fill sublanes) while keeping >= 2 grid steps so both v7x
    # TensorCores get work. On single-TC v5e/v6e the grid is a serial loop.
    BB = max(1, B // 2)
    while B % BB:
        BB -= 1
    n_steps = B // BB

    # --- BERT embeddings (data-dependent gathers are glue, stay in XLA) ---
    x = (prep["word_emb"][tokens]
         + prep["pos_emb"][:S][None, :, :]
         + prep["type_emb"][token_type_ids]).astype(jnp.float32)     # [B, S, H]

    # Additive attention-mask bias: [B, 1, S]
    mask_bias = ((1.0 - attention_mask.astype(jnp.float32)) * -10000.0
                 ).reshape(B, 1, S)

    weights = [prep[n] for n in _WEIGHT_NAMES]

    def wspec(a):
        return pl.BlockSpec(a.shape, lambda b, _n=a.ndim: (0,) * _n)

    in_specs = ([pl.BlockSpec((BB, S, H), lambda b: (b, 0, 0)),      # batch block
                 pl.BlockSpec((BB, 1, S), lambda b: (b, 0, 0))]      # its mask
                + [wspec(w) for w in weights])                       # resident weights

    kernel = functools.partial(_bert_kernel, num_layers=L, num_heads=nH,
                               head_dim=dH, eps=1e-12)

    # Advisory cost estimate for the XLA scheduler.
    flops = 2 * B * (L * (S * H * 3 * H + 2 * nH * S * S * dH
                          + S * H * H + 2 * S * H * I)
                     + H * H + H * MULTI_PAD)
    transc = B * (L * (nH * S * S + S * I) + H)
    bytes_acc = 4 * (x.size + mask_bias.size
                     + sum(int(w.size) for w in weights) + B * MULTI_PAD)

    out = pl.pallas_call(
        kernel,
        out_shape=jax.ShapeDtypeStruct((B, 1, MULTI_PAD), jnp.float32),
        grid=(n_steps,),
        in_specs=in_specs,
        out_specs=pl.BlockSpec((BB, 1, MULTI_PAD), lambda b: (b, 0, 0)),
        scratch_shapes=[pltpu.VMEM((BB, S, H), jnp.float32)],        # ctx buffer
        compiler_params=pltpu.CompilerParams(
            dimension_semantics=("parallel",),
            vmem_limit_bytes=32 * 1024 * 1024),
        cost_estimate=pl.CostEstimate(flops=flops, transcendentals=transc,
                                      bytes_accessed=bytes_acc),
    )(x, mask_bias, *weights)

    return out.reshape(B, MULTI_PAD)[:, :multi]


# ----------------------------------- Main ------------------------------------

if __name__ == "__main__":
    cfg = Config()
    multi = 3
    B, S = 4, 8

    key = jax.random.PRNGKey(0)
    k_par, k_tok, k_typ = jax.random.split(key, 3)

    params = init_params(k_par, cfg, multi)
    prep = prepare_params(params, cfg)

    tokens = jax.random.randint(k_tok, (B, S), 0, cfg.vocab_size, dtype=jnp.int32)
    token_type_ids = jax.random.randint(k_typ, (B, S), 0, cfg.type_vocab_size,
                                        dtype=jnp.int32)
    attention_mask = jnp.ones((B, S), dtype=jnp.int32)

    fwd = jax.jit(functools.partial(big_model_forward, prep, cfg, multi))
    out = fwd(tokens, token_type_ids, attention_mask)
    out = jax.block_until_ready(out)
    assert out.shape == (B, multi), out.shape
    print("KERNEL_OK")
</pallas_src>

<mosaic_0001>
module attributes {stable_mosaic.version = 11 : i64} {
  func.func @_bert_kernel(%arg0: i32, %arg1: memref<2x8x32xf32, #tpu.memory_space<vmem>>, %arg2: memref<2x1x8xf32, #tpu.memory_space<vmem>>, %arg3: memref<1x32xf32, #tpu.memory_space<vmem>>, %arg4: memref<1x32xf32, #tpu.memory_space<vmem>>, %arg5: memref<2x32x96xf32, #tpu.memory_space<vmem>>, %arg6: memref<2x1x96xf32, #tpu.memory_space<vmem>>, %arg7: memref<2x32x32xf32, #tpu.memory_space<vmem>>, %arg8: memref<2x1x32xf32, #tpu.memory_space<vmem>>, %arg9: memref<2x1x32xf32, #tpu.memory_space<vmem>>, %arg10: memref<2x1x32xf32, #tpu.memory_space<vmem>>, %arg11: memref<2x32x64xf32, #tpu.memory_space<vmem>>, %arg12: memref<2x1x64xf32, #tpu.memory_space<vmem>>, %arg13: memref<2x64x32xf32, #tpu.memory_space<vmem>>, %arg14: memref<2x1x32xf32, #tpu.memory_space<vmem>>, %arg15: memref<2x1x32xf32, #tpu.memory_space<vmem>>, %arg16: memref<2x1x32xf32, #tpu.memory_space<vmem>>, %arg17: memref<32x32xf32, #tpu.memory_space<vmem>>, %arg18: memref<1x32xf32, #tpu.memory_space<vmem>>, %arg19: memref<32x128xf32, #tpu.memory_space<vmem>>, %arg20: memref<1x128xf32, #tpu.memory_space<vmem>>, %arg21: memref<2x1x128xf32, #tpu.memory_space<vmem>>, %arg22: memref<2x8x32xf32, #tpu.memory_space<vmem>>) attributes {dimension_semantics = [#tpu.dimension_semantics<parallel>], iteration_bounds = array<i64: 2>, scalar_prefetch = 0 : i64, scratch_operands = 1 : i64, tpu.core_type = #tpu.core_type<tc>, window_params = [{transform_indices = @transform_0, window_bounds = array<i64: 2, 8, 32>}, {transform_indices = @transform_1, window_bounds = array<i64: 2, 1, 8>}, {pipeline_mode = #tpu.pipeline_mode<synchronous>, transform_indices = @transform_2, window_bounds = array<i64: 1, 32>}, {pipeline_mode = #tpu.pipeline_mode<synchronous>, transform_indices = @transform_3, window_bounds = array<i64: 1, 32>}, {pipeline_mode = #tpu.pipeline_mode<synchronous>, transform_indices = @transform_4, window_bounds = array<i64: 2, 32, 96>}, {pipeline_mode = #tpu.pipeline_mode<synchronous>, transform_indices = @transform_5, window_bounds = array<i64: 2, 1, 96>}, {pipeline_mode = #tpu.pipeline_mode<synchronous>, transform_indices = @transform_6, window_bounds = array<i64: 2, 32, 32>}, {pipeline_mode = #tpu.pipeline_mode<synchronous>, transform_indices = @transform_7, window_bounds = array<i64: 2, 1, 32>}, {pipeline_mode = #tpu.pipeline_mode<synchronous>, transform_indices = @transform_8, window_bounds = array<i64: 2, 1, 32>}, {pipeline_mode = #tpu.pipeline_mode<synchronous>, transform_indices = @transform_9, window_bounds = array<i64: 2, 1, 32>}, {pipeline_mode = #tpu.pipeline_mode<synchronous>, transform_indices = @transform_10, window_bounds = array<i64: 2, 32, 64>}, {pipeline_mode = #tpu.pipeline_mode<synchronous>, transform_indices = @transform_11, window_bounds = array<i64: 2, 1, 64>}, {pipeline_mode = #tpu.pipeline_mode<synchronous>, transform_indices = @transform_12, window_bounds = array<i64: 2, 64, 32>}, {pipeline_mode = #tpu.pipeline_mode<synchronous>, transform_indices = @transform_13, window_bounds = array<i64: 2, 1, 32>}, {pipeline_mode = #tpu.pipeline_mode<synchronous>, transform_indices = @transform_14, window_bounds = array<i64: 2, 1, 32>}, {pipeline_mode = #tpu.pipeline_mode<synchronous>, transform_indices = @transform_15, window_bounds = array<i64: 2, 1, 32>}, {pipeline_mode = #tpu.pipeline_mode<synchronous>, transform_indices = @transform_16, window_bounds = array<i64: 32, 32>}, {pipeline_mode = #tpu.pipeline_mode<synchronous>, transform_indices = @transform_17, window_bounds = array<i64: 1, 32>}, {pipeline_mode = #tpu.pipeline_mode<synchronous>, transform_indices = @transform_18, window_bounds = array<i64: 32, 128>}, {pipeline_mode = #tpu.pipeline_mode<synchronous>, transform_indices = @transform_19, window_bounds = array<i64: 1, 128>}, {transform_indices = @transform_20, window_bounds = array<i64: 2, 1, 128>}]} {
    %c0 = arith.constant 0 : index
    %c0_0 = arith.constant 0 : index
    %c0_1 = arith.constant 0 : index
    %0 = vector.load %arg1[%c0, %c0_0, %c0_1] : memref<2x8x32xf32, #tpu.memory_space<vmem>>, vector<2x8x32xf32>
    %c0_2 = arith.constant 0 : index
    %c0_3 = arith.constant 0 : index
    %c0_4 = arith.constant 0 : index
    %1 = vector.load %arg2[%c0_2, %c0_3, %c0_4] : memref<2x1x8xf32, #tpu.memory_space<vmem>>, vector<2x1x8xf32>
    %2 = vector.shape_cast %1 : vector<2x1x8xf32> to vector<2x1x8xf32>
    %3 = vector.broadcast %2 : vector<2x1x8xf32> to vector<2x8x8xf32>
    %c0_5 = arith.constant 0 : index
    %c0_6 = arith.constant 0 : index
    %4 = vector.load %arg3[%c0_5, %c0_6] : memref<1x32xf32, #tpu.memory_space<vmem>>, vector<1x32xf32>
    %c0_7 = arith.constant 0 : index
    %c0_8 = arith.constant 0 : index
    %5 = vector.load %arg4[%c0_7, %c0_8] : memref<1x32xf32, #tpu.memory_space<vmem>>, vector<1x32xf32>
    %cst = arith.constant dense<0.000000e+00> : vector<2x8xf32>
    %6 = vector.multi_reduction <add>, %0, %cst [2] : vector<2x8x32xf32> to vector<2x8xf32>
    %7 = vector.shape_cast %6 : vector<2x8xf32> to vector<2x8x1xf32>
    %cst_9 = arith.constant 3.200000e+01 : f32
    %8 = vector.broadcast %cst_9 : f32 to vector<2x8x1xf32>
    %9 = arith.divf %7, %8 : vector<2x8x1xf32>
    %10 = vector.broadcast %9 : vector<2x8x1xf32> to vector<2x8x32xf32>
    %11 = arith.subf %0, %10 : vector<2x8x32xf32>
    %12 = arith.mulf %11, %11 : vector<2x8x32xf32>
    %cst_10 = arith.constant dense<0.000000e+00> : vector<2x8xf32>
    %13 = vector.multi_reduction <add>, %12, %cst_10 [2] : vector<2x8x32xf32> to vector<2x8xf32>
    %14 = vector.shape_cast %13 : vector<2x8xf32> to vector<2x8x1xf32>
    %cst_11 = arith.constant 3.200000e+01 : f32
    %15 = vector.broadcast %cst_11 : f32 to vector<2x8x1xf32>
    %16 = arith.divf %14, %15 : vector<2x8x1xf32>
    %17 = vector.broadcast %9 : vector<2x8x1xf32> to vector<2x8x32xf32>
    %18 = arith.subf %0, %17 : vector<2x8x32xf32>
    %cst_12 = arith.constant 9.99999996E-13 : f32
    %19 = vector.broadcast %cst_12 : f32 to vector<2x8x1xf32>
    %20 = arith.addf %16, %19 : vector<2x8x1xf32>
    %21 = math.rsqrt %20 : vector<2x8x1xf32>
    %22 = vector.broadcast %21 : vector<2x8x1xf32> to vector<2x8x32xf32>
    %23 = arith.mulf %18, %22 : vector<2x8x32xf32>
    %24 = vector.shape_cast %4 : vector<1x32xf32> to vector<1x1x32xf32>
    %25 = vector.broadcast %24 : vector<1x1x32xf32> to vector<2x8x32xf32>
    %26 = arith.mulf %23, %25 : vector<2x8x32xf32>
    %27 = vector.shape_cast %5 : vector<1x32xf32> to vector<1x1x32xf32>
    %28 = vector.broadcast %27 : vector<1x1x32xf32> to vector<2x8x32xf32>
    %29 = arith.addf %26, %28 : vector<2x8x32xf32>
    %c0_13 = arith.constant 0 : index
    %c0_14 = arith.constant 0 : index
    %c0_15 = arith.constant 0 : index
    %30 = vector.load %arg5[%c0_13, %c0_14, %c0_15] : memref<2x32x96xf32, #tpu.memory_space<vmem>>, vector<1x32x96xf32>
    %31 = vector.shape_cast %30 : vector<1x32x96xf32> to vector<32x96xf32>
    %c0_16 = arith.constant 0 : index
    %c0_17 = arith.constant 0 : index
    %c0_18 = arith.constant 0 : index
    %32 = vector.load %arg6[%c0_16, %c0_17, %c0_18] : memref<2x1x96xf32, #tpu.memory_space<vmem>>, vector<1x1x96xf32>
    %33 = vector.shape_cast %32 : vector<1x1x96xf32> to vector<1x96xf32>
    %cst_19 = arith.constant dense<0.000000e+00> : vector<2x8x96xf32>
    %34 = tpu.matmul %29, %31, %cst_19 {dimension_numbers = #tpu.dot_dimension_numbers<[2], [0], [0, 1], [1], [0, 0, 0, 1, 1, 1], [], []>} : vector<2x8x32xf32>, vector<32x96xf32>, vector<2x8x96xf32> -> vector<2x8x96xf32>
    %35 = vector.shape_cast %33 : vector<1x96xf32> to vector<1x1x96xf32>
    %36 = vector.broadcast %35 : vector<1x1x96xf32> to vector<2x8x96xf32>
    %37 = arith.addf %34, %36 : vector<2x8x96xf32>
    %38 = vector.extract_strided_slice %37 {offsets = [0, 0, 0], sizes = [2, 8, 32], strides = [1, 1, 1]} : vector<2x8x96xf32> to vector<2x8x32xf32>
    %39 = vector.extract_strided_slice %37 {offsets = [0, 0, 32], sizes = [2, 8, 32], strides = [1, 1, 1]} : vector<2x8x96xf32> to vector<2x8x32xf32>
    %40 = vector.extract_strided_slice %37 {offsets = [0, 0, 64], sizes = [2, 8, 32], strides = [1, 1, 1]} : vector<2x8x96xf32> to vector<2x8x32xf32>
    %41 = vector.extract_strided_slice %38 {offsets = [0, 0, 0], sizes = [2, 8, 16], strides = [1, 1, 1]} : vector<2x8x32xf32> to vector<2x8x16xf32>
    %42 = vector.extract_strided_slice %39 {offsets = [0, 0, 0], sizes = [2, 8, 16], strides = [1, 1, 1]} : vector<2x8x32xf32> to vector<2x8x16xf32>
    %43 = vector.extract_strided_slice %40 {offsets = [0, 0, 0], sizes = [2, 8, 16], strides = [1, 1, 1]} : vector<2x8x32xf32> to vector<2x8x16xf32>
    "tpu.trace_start"() <{level = 10 : i32, message = "bqd,bkd->bqk"}> : () -> ()
    %cst_20 = arith.constant dense<0.000000e+00> : vector<2x8x8xf32>
    %44 = tpu.matmul %41, %42, %cst_20 {dimension_numbers = #tpu.dot_dimension_numbers<[2], [2], [1], [1], [0, 0, 0, 1, 1, 1], [0], [0]>} : vector<2x8x16xf32>, vector<2x8x16xf32>, vector<2x8x8xf32> -> vector<2x8x8xf32>
    "tpu.trace_stop"() : () -> ()
    %45 = arith.addf %44, %3 : vector<2x8x8xf32>
    %cst_21 = arith.constant dense<0xFF800000> : vector<2x8xf32>
    %46 = vector.multi_reduction <maximumf>, %45, %cst_21 [2] : vector<2x8x8xf32> to vector<2x8xf32>
    %47 = vector.shape_cast %46 : vector<2x8xf32> to vector<2x8x1xf32>
    %48 = vector.broadcast %47 : vector<2x8x1xf32> to vector<2x8x8xf32>
    %49 = arith.subf %45, %48 : vector<2x8x8xf32>
    %50 = math.exp %49 : vector<2x8x8xf32>
    %cst_22 = arith.constant dense<0.000000e+00> : vector<2x8xf32>
    %51 = vector.multi_reduction <add>, %50, %cst_22 [2] : vector<2x8x8xf32> to vector<2x8xf32>
    %52 = vector.shape_cast %51 : vector<2x8xf32> to vector<2x8x1xf32>
    %53 = tpu.reciprocal %52 {approx = true} : vector<2x8x1xf32> -> vector<2x8x1xf32>
    %54 = vector.broadcast %53 : vector<2x8x1xf32> to vector<2x8x8xf32>
    %55 = arith.mulf %50, %54 : vector<2x8x8xf32>
    "tpu.trace_start"() <{level = 10 : i32, message = "bqk,bkd->bqd"}> : () -> ()
    %cst_23 = arith.constant dense<0.000000e+00> : vector<2x8x16xf32>
    %56 = tpu.matmul %55, %43, %cst_23 {dimension_numbers = #tpu.dot_dimension_numbers<[2], [1], [1], [2], [0, 0, 0, 1, 1, 2], [0], [0]>} : vector<2x8x8xf32>, vector<2x8x16xf32>, vector<2x8x16xf32> -> vector<2x8x16xf32>
    "tpu.trace_stop"() : () -> ()
    %c0_24 = arith.constant 0 : index
    %c0_25 = arith.constant 0 : index
    %c0_26 = arith.constant 0 : index
    %57 = vector.load %arg22[%c0_24, %c0_25, %c0_26] : memref<2x8x32xf32, #tpu.memory_space<vmem>>, vector<2x8x16xf32>
    tpu.vector_store %arg22[%c0_24, %c0_25, %c0_26], %56 {strides = array<i32>} : memref<2x8x32xf32, #tpu.memory_space<vmem>>, vector<2x8x16xf32>,
    %58 = vector.extract_strided_slice %38 {offsets = [0, 0, 16], sizes = [2, 8, 16], strides = [1, 1, 1]} : vector<2x8x32xf32> to vector<2x8x16xf32>
    %59 = vector.extract_strided_slice %39 {offsets = [0, 0, 16], sizes = [2, 8, 16], strides = [1, 1, 1]} : vector<2x8x32xf32> to vector<2x8x16xf32>
    %60 = vector.extract_strided_slice %40 {offsets = [0, 0, 16], sizes = [2, 8, 16], strides = [1, 1, 1]} : vector<2x8x32xf32> to vector<2x8x16xf32>
    "tpu.trace_start"() <{level = 10 : i32, message = "bqd,bkd->bqk"}> : () -> ()
    %cst_27 = arith.constant dense<0.000000e+00> : vector<2x8x8xf32>
    %61 = tpu.matmul %58, %59, %cst_27 {dimension_numbers = #tpu.dot_dimension_numbers<[2], [2], [1], [1], [0, 0, 0, 1, 1, 1], [0], [0]>} : vector<2x8x16xf32>, vector<2x8x16xf32>, vector<2x8x8xf32> -> vector<2x8x8xf32>
    "tpu.trace_stop"() : () -> ()
    %62 = arith.addf %61, %3 : vector<2x8x8xf32>
    %cst_28 = arith.constant dense<0xFF800000> : vector<2x8xf32>
    %63 = vector.multi_reduction <maximumf>, %62, %cst_28 [2] : vector<2x8x8xf32> to vector<2x8xf32>
    %64 = vector.shape_cast %63 : vector<2x8xf32> to vector<2x8x1xf32>
    %65 = vector.broadcast %64 : vector<2x8x1xf32> to vector<2x8x8xf32>
    %66 = arith.subf %62, %65 : vector<2x8x8xf32>
    %67 = math.exp %66 : vector<2x8x8xf32>
    %cst_29 = arith.constant dense<0.000000e+00> : vector<2x8xf32>
    %68 = vector.multi_reduction <add>, %67, %cst_29 [2] : vector<2x8x8xf32> to vector<2x8xf32>
    %69 = vector.shape_cast %68 : vector<2x8xf32> to vector<2x8x1xf32>
    %70 = tpu.reciprocal %69 {approx = true} : vector<2x8x1xf32> -> vector<2x8x1xf32>
    %71 = vector.broadcast %70 : vector<2x8x1xf32> to vector<2x8x8xf32>
    %72 = arith.mulf %67, %71 : vector<2x8x8xf32>
    "tpu.trace_start"() <{level = 10 : i32, message = "bqk,bkd->bqd"}> : () -> ()
    %cst_30 = arith.constant dense<0.000000e+00> : vector<2x8x16xf32>
    %73 = tpu.matmul %72, %60, %cst_30 {dimension_numbers = #tpu.dot_dimension_numbers<[2], [1], [1], [2], [0, 0, 0, 1, 1, 2], [0], [0]>} : vector<2x8x8xf32>, vector<2x8x16xf32>, vector<2x8x16xf32> -> vector<2x8x16xf32>
    "tpu.trace_stop"() : () -> ()
    %c0_31 = arith.constant 0 : index
    %c0_32 = arith.constant 0 : index
    %c16 = arith.constant 16 : index
    %74 = vector.load %arg22[%c0_31, %c0_32, %c16] : memref<2x8x32xf32, #tpu.memory_space<vmem>>, vector<2x8x16xf32>
    tpu.vector_store %arg22[%c0_31, %c0_32, %c16], %73 {strides = array<i32>} : memref<2x8x32xf32, #tpu.memory_space<vmem>>, vector<2x8x16xf32>,
    %c0_33 = arith.constant 0 : index
    %c0_34 = arith.constant 0 : index
    %c0_35 = arith.constant 0 : index
    %75 = vector.load %arg22[%c0_33, %c0_34, %c0_35] : memref<2x8x32xf32, #tpu.memory_space<vmem>>, vector<2x8x32xf32>
    %c0_36 = arith.constant 0 : index
    %c0_37 = arith.constant 0 : index
    %c0_38 = arith.constant 0 : index
    %76 = vector.load %arg7[%c0_36, %c0_37, %c0_38] : memref<2x32x32xf32, #tpu.memory_space<vmem>>, vector<1x32x32xf32>
    %77 = vector.shape_cast %76 : vector<1x32x32xf32> to vector<32x32xf32>
    %c0_39 = arith.constant 0 : index
    %c0_40 = arith.constant 0 : index
    %c0_41 = arith.constant 0 : index
    %78 = vector.load %arg8[%c0_39, %c0_40, %c0_41] : memref<2x1x32xf32, #tpu.memory_space<vmem>>, vector<1x1x32xf32>
    %79 = vector.shape_cast %78 : vector<1x1x32xf32> to vector<1x32xf32>
    %cst_42 = arith.constant dense<0.000000e+00> : vector<2x8x32xf32>
    %80 = tpu.matmul %75, %77, %cst_42 {dimension_numbers = #tpu.dot_dimension_numbers<[2], [0], [0, 1], [1], [0, 0, 0, 1, 1, 1], [], []>} : vector<2x8x32xf32>, vector<32x32xf32>, vector<2x8x32xf32> -> vector<2x8x32xf32>
    %81 = vector.shape_cast %79 : vector<1x32xf32> to vector<1x1x32xf32>
    %82 = vector.broadcast %81 : vector<1x1x32xf32> to vector<2x8x32xf32>
    %83 = arith.addf %80, %82 : vector<2x8x32xf32>
    %84 = arith.addf %29, %83 : vector<2x8x32xf32>
    %c0_43 = arith.constant 0 : index
    %c0_44 = arith.constant 0 : index
    %c0_45 = arith.constant 0 : index
    %85 = vector.load %arg9[%c0_43, %c0_44, %c0_45] : memref<2x1x32xf32, #tpu.memory_space<vmem>>, vector<1x1x32xf32>
    %86 = vector.shape_cast %85 : vector<1x1x32xf32> to vector<1x32xf32>
    %c0_46 = arith.constant 0 : index
    %c0_47 = arith.constant 0 : index
    %c0_48 = arith.constant 0 : index
    %87 = vector.load %arg10[%c0_46, %c0_47, %c0_48] : memref<2x1x32xf32, #tpu.memory_space<vmem>>, vector<1x1x32xf32>
    %88 = vector.shape_cast %87 : vector<1x1x32xf32> to vector<1x32xf32>
    %cst_49 = arith.constant dense<0.000000e+00> : vector<2x8xf32>
    %89 = vector.multi_reduction <add>, %84, %cst_49 [2] : vector<2x8x32xf32> to vector<2x8xf32>
    %90 = vector.shape_cast %89 : vector<2x8xf32> to vector<2x8x1xf32>
    %cst_50 = arith.constant 3.200000e+01 : f32
    %91 = vector.broadcast %cst_50 : f32 to vector<2x8x1xf32>
    %92 = arith.divf %90, %91 : vector<2x8x1xf32>
    %93 = vector.broadcast %92 : vector<2x8x1xf32> to vector<2x8x32xf32>
    %94 = arith.subf %84, %93 : vector<2x8x32xf32>
    %95 = arith.mulf %94, %94 : vector<2x8x32xf32>
    %cst_51 = arith.constant dense<0.000000e+00> : vector<2x8xf32>
    %96 = vector.multi_reduction <add>, %95, %cst_51 [2] : vector<2x8x32xf32> to vector<2x8xf32>
    %97 = vector.shape_cast %96 : vector<2x8xf32> to vector<2x8x1xf32>
    %cst_52 = arith.constant 3.200000e+01 : f32
    %98 = vector.broadcast %cst_52 : f32 to vector<2x8x1xf32>
    %99 = arith.divf %97, %98 : vector<2x8x1xf32>
    %100 = vector.broadcast %92 : vector<2x8x1xf32> to vector<2x8x32xf32>
    %101 = arith.subf %84, %100 : vector<2x8x32xf32>
    %cst_53 = arith.constant 9.99999996E-13 : f32
    %102 = vector.broadcast %cst_53 : f32 to vector<2x8x1xf32>
    %103 = arith.addf %99, %102 : vector<2x8x1xf32>
    %104 = math.rsqrt %103 : vector<2x8x1xf32>
    %105 = vector.broadcast %104 : vector<2x8x1xf32> to vector<2x8x32xf32>
    %106 = arith.mulf %101, %105 : vector<2x8x32xf32>
    %107 = vector.shape_cast %86 : vector<1x32xf32> to vector<1x1x32xf32>
    %108 = vector.broadcast %107 : vector<1x1x32xf32> to vector<2x8x32xf32>
    %109 = arith.mulf %106, %108 : vector<2x8x32xf32>
    %110 = vector.shape_cast %88 : vector<1x32xf32> to vector<1x1x32xf32>
    %111 = vector.broadcast %110 : vector<1x1x32xf32> to vector<2x8x32xf32>
    %112 = arith.addf %109, %111 : vector<2x8x32xf32>
    %c0_54 = arith.constant 0 : index
    %c0_55 = arith.constant 0 : index
    %c0_56 = arith.constant 0 : index
    %113 = vector.load %arg11[%c0_54, %c0_55, %c0_56] : memref<2x32x64xf32, #tpu.memory_space<vmem>>, vector<1x32x64xf32>
    %114 = vector.shape_cast %113 : vector<1x32x64xf32> to vector<32x64xf32>
    %c0_57 = arith.constant 0 : index
    %c0_58 = arith.constant 0 : index
    %c0_59 = arith.constant 0 : index
    %115 = vector.load %arg12[%c0_57, %c0_58, %c0_59] : memref<2x1x64xf32, #tpu.memory_space<vmem>>, vector<1x1x64xf32>
    %116 = vector.shape_cast %115 : vector<1x1x64xf32> to vector<1x64xf32>
    %cst_60 = arith.constant dense<0.000000e+00> : vector<2x8x64xf32>
    %117 = tpu.matmul %112, %114, %cst_60 {dimension_numbers = #tpu.dot_dimension_numbers<[2], [0], [0, 1], [1], [0, 0, 0, 1, 1, 1], [], []>} : vector<2x8x32xf32>, vector<32x64xf32>, vector<2x8x64xf32> -> vector<2x8x64xf32>
    %118 = vector.shape_cast %116 : vector<1x64xf32> to vector<1x1x64xf32>
    %119 = vector.broadcast %118 : vector<1x1x64xf32> to vector<2x8x64xf32>
    %120 = arith.addf %117, %119 : vector<2x8x64xf32>
    %121 = arith.mulf %120, %120 : vector<2x8x64xf32>
    %122 = arith.mulf %120, %121 : vector<2x8x64xf32>
    %cst_61 = arith.constant 4.471500e-02 : f32
    %123 = vector.broadcast %cst_61 : f32 to vector<2x8x64xf32>
    %124 = arith.mulf %123, %122 : vector<2x8x64xf32>
    %125 = arith.addf %120, %124 : vector<2x8x64xf32>
    %cst_62 = arith.constant 0.797884583 : f32
    %126 = vector.broadcast %cst_62 : f32 to vector<2x8x64xf32>
    %127 = arith.mulf %126, %125 : vector<2x8x64xf32>
    %128 = math.tanh %127 : vector<2x8x64xf32>
    %cst_63 = arith.constant 1.000000e+00 : f32
    %129 = vector.broadcast %cst_63 : f32 to vector<2x8x64xf32>
    %130 = arith.addf %129, %128 : vector<2x8x64xf32>
    %cst_64 = arith.constant 5.000000e-01 : f32
    %131 = vector.broadcast %cst_64 : f32 to vector<2x8x64xf32>
    %132 = arith.mulf %131, %130 : vector<2x8x64xf32>
    %133 = arith.mulf %120, %132 : vector<2x8x64xf32>
    %c0_65 = arith.constant 0 : index
    %c0_66 = arith.constant 0 : index
    %c0_67 = arith.constant 0 : index
    %134 = vector.load %arg13[%c0_65, %c0_66, %c0_67] : memref<2x64x32xf32, #tpu.memory_space<vmem>>, vector<1x64x32xf32>
    %135 = vector.shape_cast %134 : vector<1x64x32xf32> to vector<64x32xf32>
    %c0_68 = arith.constant 0 : index
    %c0_69 = arith.constant 0 : index
    %c0_70 = arith.constant 0 : index
    %136 = vector.load %arg14[%c0_68, %c0_69, %c0_70] : memref<2x1x32xf32, #tpu.memory_space<vmem>>, vector<1x1x32xf32>
    %137 = vector.shape_cast %136 : vector<1x1x32xf32> to vector<1x32xf32>
    %cst_71 = arith.constant dense<0.000000e+00> : vector<2x8x32xf32>
    %138 = tpu.matmul %133, %135, %cst_71 {dimension_numbers = #tpu.dot_dimension_numbers<[2], [0], [0, 1], [1], [0, 0, 0, 1, 1, 1], [], []>} : vector<2x8x64xf32>, vector<64x32xf32>, vector<2x8x32xf32> -> vector<2x8x32xf32>
    %139 = vector.shape_cast %137 : vector<1x32xf32> to vector<1x1x32xf32>
    %140 = vector.broadcast %139 : vector<1x1x32xf32> to vector<2x8x32xf32>
    %141 = arith.addf %138, %140 : vector<2x8x32xf32>
    %142 = arith.addf %112, %141 : vector<2x8x32xf32>
    %c0_72 = arith.constant 0 : index
    %c0_73 = arith.constant 0 : index
    %c0_74 = arith.constant 0 : index
    %143 = vector.load %arg15[%c0_72, %c0_73, %c0_74] : memref<2x1x32xf32, #tpu.memory_space<vmem>>, vector<1x1x32xf32>
    %144 = vector.shape_cast %143 : vector<1x1x32xf32> to vector<1x32xf32>
    %c0_75 = arith.constant 0 : index
    %c0_76 = arith.constant 0 : index
    %c0_77 = arith.constant 0 : index
    %145 = vector.load %arg16[%c0_75, %c0_76, %c0_77] : memref<2x1x32xf32, #tpu.memory_space<vmem>>, vector<1x1x32xf32>
    %146 = vector.shape_cast %145 : vector<1x1x32xf32> to vector<1x32xf32>
    %cst_78 = arith.constant dense<0.000000e+00> : vector<2x8xf32>
    %147 = vector.multi_reduction <add>, %142, %cst_78 [2] : vector<2x8x32xf32> to vector<2x8xf32>
    %148 = vector.shape_cast %147 : vector<2x8xf32> to vector<2x8x1xf32>
    %cst_79 = arith.constant 3.200000e+01 : f32
    %149 = vector.broadcast %cst_79 : f32 to vector<2x8x1xf32>
    %150 = arith.divf %148, %149 : vector<2x8x1xf32>
    %151 = vector.broadcast %150 : vector<2x8x1xf32> to vector<2x8x32xf32>
    %152 = arith.subf %142, %151 : vector<2x8x32xf32>
    %153 = arith.mulf %152, %152 : vector<2x8x32xf32>
    %cst_80 = arith.constant dense<0.000000e+00> : vector<2x8xf32>
    %154 = vector.multi_reduction <add>, %153, %cst_80 [2] : vector<2x8x32xf32> to vector<2x8xf32>
    %155 = vector.shape_cast %154 : vector<2x8xf32> to vector<2x8x1xf32>
    %cst_81 = arith.constant 3.200000e+01 : f32
    %156 = vector.broadcast %cst_81 : f32 to vector<2x8x1xf32>
    %157 = arith.divf %155, %156 : vector<2x8x1xf32>
    %158 = vector.broadcast %150 : vector<2x8x1xf32> to vector<2x8x32xf32>
    %159 = arith.subf %142, %158 : vector<2x8x32xf32>
    %cst_82 = arith.constant 9.99999996E-13 : f32
    %160 = vector.broadcast %cst_82 : f32 to vector<2x8x1xf32>
    %161 = arith.addf %157, %160 : vector<2x8x1xf32>
    %162 = math.rsqrt %161 : vector<2x8x1xf32>
    %163 = vector.broadcast %162 : vector<2x8x1xf32> to vector<2x8x32xf32>
    %164 = arith.mulf %159, %163 : vector<2x8x32xf32>
    %165 = vector.shape_cast %144 : vector<1x32xf32> to vector<1x1x32xf32>
    %166 = vector.broadcast %165 : vector<1x1x32xf32> to vector<2x8x32xf32>
    %167 = arith.mulf %164, %166 : vector<2x8x32xf32>
    %168 = vector.shape_cast %146 : vector<1x32xf32> to vector<1x1x32xf32>
    %169 = vector.broadcast %168 : vector<1x1x32xf32> to vector<2x8x32xf32>
    %170 = arith.addf %167, %169 : vector<2x8x32xf32>
    %c1 = arith.constant 1 : index
    %c0_83 = arith.constant 0 : index
    %c0_84 = arith.constant 0 : index
    %171 = vector.load %arg5[%c1, %c0_83, %c0_84] : memref<2x32x96xf32, #tpu.memory_space<vmem>>, vector<1x32x96xf32>
    %172 = vector.shape_cast %171 : vector<1x32x96xf32> to vector<32x96xf32>
    %c1_85 = arith.constant 1 : index
    %c0_86 = arith.constant 0 : index
    %c0_87 = arith.constant 0 : index
    %173 = vector.load %arg6[%c1_85, %c0_86, %c0_87] : memref<2x1x96xf32, #tpu.memory_space<vmem>>, vector<1x1x96xf32>
    %174 = vector.shape_cast %173 : vector<1x1x96xf32> to vector<1x96xf32>
    %cst_88 = arith.constant dense<0.000000e+00> : vector<2x8x96xf32>
    %175 = tpu.matmul %170, %172, %cst_88 {dimension_numbers = #tpu.dot_dimension_numbers<[2], [0], [0, 1], [1], [0, 0, 0, 1, 1, 1], [], []>} : vector<2x8x32xf32>, vector<32x96xf32>, vector<2x8x96xf32> -> vector<2x8x96xf32>
    %176 = vector.shape_cast %174 : vector<1x96xf32> to vector<1x1x96xf32>
    %177 = vector.broadcast %176 : vector<1x1x96xf32> to vector<2x8x96xf32>
    %178 = arith.addf %175, %177 : vector<2x8x96xf32>
    %179 = vector.extract_strided_slice %178 {offsets = [0, 0, 0], sizes = [2, 8, 32], strides = [1, 1, 1]} : vector<2x8x96xf32> to vector<2x8x32xf32>
    %180 = vector.extract_strided_slice %178 {offsets = [0, 0, 32], sizes = [2, 8, 32], strides = [1, 1, 1]} : vector<2x8x96xf32> to vector<2x8x32xf32>
    %181 = vector.extract_strided_slice %178 {offsets = [0, 0, 64], sizes = [2, 8, 32], strides = [1, 1, 1]} : vector<2x8x96xf32> to vector<2x8x32xf32>
    %182 = vector.extract_strided_slice %179 {offsets = [0, 0, 0], sizes = [2, 8, 16], strides = [1, 1, 1]} : vector<2x8x32xf32> to vector<2x8x16xf32>
    %183 = vector.extract_strided_slice %180 {offsets = [0, 0, 0], sizes = [2, 8, 16], strides = [1, 1, 1]} : vector<2x8x32xf32> to vector<2x8x16xf32>
    %184 = vector.extract_strided_slice %181 {offsets = [0, 0, 0], sizes = [2, 8, 16], strides = [1, 1, 1]} : vector<2x8x32xf32> to vector<2x8x16xf32>
    "tpu.trace_start"() <{level = 10 : i32, message = "bqd,bkd->bqk"}> : () -> ()
    %cst_89 = arith.constant dense<0.000000e+00> : vector<2x8x8xf32>
    %185 = tpu.matmul %182, %183, %cst_89 {dimension_numbers = #tpu.dot_dimension_numbers<[2], [2], [1], [1], [0, 0, 0, 1, 1, 1], [0], [0]>} : vector<2x8x16xf32>, vector<2x8x16xf32>, vector<2x8x8xf32> -> vector<2x8x8xf32>
    "tpu.trace_stop"() : () -> ()
    %186 = arith.addf %185, %3 : vector<2x8x8xf32>
    %cst_90 = arith.constant dense<0xFF800000> : vector<2x8xf32>
    %187 = vector.multi_reduction <maximumf>, %186, %cst_90 [2] : vector<2x8x8xf32> to vector<2x8xf32>
    %188 = vector.shape_cast %187 : vector<2x8xf32> to vector<2x8x1xf32>
    %189 = vector.broadcast %188 : vector<2x8x1xf32> to vector<2x8x8xf32>
    %190 = arith.subf %186, %189 : vector<2x8x8xf32>
    %191 = math.exp %190 : vector<2x8x8xf32>
    %cst_91 = arith.constant dense<0.000000e+00> : vector<2x8xf32>
    %192 = vector.multi_reduction <add>, %191, %cst_91 [2] : vector<2x8x8xf32> to vector<2x8xf32>
    %193 = vector.shape_cast %192 : vector<2x8xf32> to vector<2x8x1xf32>
    %194 = tpu.reciprocal %193 {approx = true} : vector<2x8x1xf32> -> vector<2x8x1xf32>
    %195 = vector.broadcast %194 : vector<2x8x1xf32> to vector<2x8x8xf32>
    %196 = arith.mulf %191, %195 : vector<2x8x8xf32>
    "tpu.trace_start"() <{level = 10 : i32, message = "bqk,bkd->bqd"}> : () -> ()
    %cst_92 = arith.constant dense<0.000000e+00> : vector<2x8x16xf32>
    %197 = tpu.matmul %196, %184, %cst_92 {dimension_numbers = #tpu.dot_dimension_numbers<[2], [1], [1], [2], [0, 0, 0, 1, 1, 2], [0], [0]>} : vector<2x8x8xf32>, vector<2x8x16xf32>, vector<2x8x16xf32> -> vector<2x8x16xf32>
    "tpu.trace_stop"() : () -> ()
    %c0_93 = arith.constant 0 : index
    %c0_94 = arith.constant 0 : index
    %c0_95 = arith.constant 0 : index
    %198 = vector.load %arg22[%c0_93, %c0_94, %c0_95] : memref<2x8x32xf32, #tpu.memory_space<vmem>>, vector<2x8x16xf32>
    tpu.vector_store %arg22[%c0_93, %c0_94, %c0_95], %197 {strides = array<i32>} : memref<2x8x32xf32, #tpu.memory_space<vmem>>, vector<2x8x16xf32>,
    %199 = vector.extract_strided_slice %179 {offsets = [0, 0, 16], sizes = [2, 8, 16], strides = [1, 1, 1]} : vector<2x8x32xf32> to vector<2x8x16xf32>
    %200 = vector.extract_strided_slice %180 {offsets = [0, 0, 16], sizes = [2, 8, 16], strides = [1, 1, 1]} : vector<2x8x32xf32> to vector<2x8x16xf32>
    %201 = vector.extract_strided_slice %181 {offsets = [0, 0, 16], sizes = [2, 8, 16], strides = [1, 1, 1]} : vector<2x8x32xf32> to vector<2x8x16xf32>
    "tpu.trace_start"() <{level = 10 : i32, message = "bqd,bkd->bqk"}> : () -> ()
    %cst_96 = arith.constant dense<0.000000e+00> : vector<2x8x8xf32>
    %202 = tpu.matmul %199, %200, %cst_96 {dimension_numbers = #tpu.dot_dimension_numbers<[2], [2], [1], [1], [0, 0, 0, 1, 1, 1], [0], [0]>} : vector<2x8x16xf32>, vector<2x8x16xf32>, vector<2x8x8xf32> -> vector<2x8x8xf32>
    "tpu.trace_stop"() : () -> ()
    %203 = arith.addf %202, %3 : vector<2x8x8xf32>
    %cst_97 = arith.constant dense<0xFF800000> : vector<2x8xf32>
    %204 = vector.multi_reduction <maximumf>, %203, %cst_97 [2] : vector<2x8x8xf32> to vector<2x8xf32>
    %205 = vector.shape_cast %204 : vector<2x8xf32> to vector<2x8x1xf32>
    %206 = vector.broadcast %205 : vector<2x8x1xf32> to vector<2x8x8xf32>
    %207 = arith.subf %203, %206 : vector<2x8x8xf32>
    %208 = math.exp %207 : vector<2x8x8xf32>
    %cst_98 = arith.constant dense<0.000000e+00> : vector<2x8xf32>
    %209 = vector.multi_reduction <add>, %208, %cst_98 [2] : vector<2x8x8xf32> to vector<2x8xf32>
    %210 = vector.shape_cast %209 : vector<2x8xf32> to vector<2x8x1xf32>
    %211 = tpu.reciprocal %210 {approx = true} : vector<2x8x1xf32> -> vector<2x8x1xf32>
    %212 = vector.broadcast %211 : vector<2x8x1xf32> to vector<2x8x8xf32>
    %213 = arith.mulf %208, %212 : vector<2x8x8xf32>
    "tpu.trace_start"() <{level = 10 : i32, message = "bqk,bkd->bqd"}> : () -> ()
    %cst_99 = arith.constant dense<0.000000e+00> : vector<2x8x16xf32>
    %214 = tpu.matmul %213, %201, %cst_99 {dimension_numbers = #tpu.dot_dimension_numbers<[2], [1], [1], [2], [0, 0, 0, 1, 1, 2], [0], [0]>} : vector<2x8x8xf32>, vector<2x8x16xf32>, vector<2x8x16xf32> -> vector<2x8x16xf32>
    "tpu.trace_stop"() : () -> ()
    %c0_100 = arith.constant 0 : index
    %c0_101 = arith.constant 0 : index
    %c16_102 = arith.constant 16 : index
    %215 = vector.load %arg22[%c0_100, %c0_101, %c16_102] : memref<2x8x32xf32, #tpu.memory_space<vmem>>, vector<2x8x16xf32>
    tpu.vector_store %arg22[%c0_100, %c0_101, %c16_102], %214 {strides = array<i32>} : memref<2x8x32xf32, #tpu.memory_space<vmem>>, vector<2x8x16xf32>,
    %c0_103 = arith.constant 0 : index
    %c0_104 = arith.constant 0 : index
    %c0_105 = arith.constant 0 : index
    %216 = vector.load %arg22[%c0_103, %c0_104, %c0_105] : memref<2x8x32xf32, #tpu.memory_space<vmem>>, vector<2x8x32xf32>
    %c1_106 = arith.constant 1 : index
    %c0_107 = arith.constant 0 : index
    %c0_108 = arith.constant 0 : index
    %217 = vector.load %arg7[%c1_106, %c0_107, %c0_108] : memref<2x32x32xf32, #tpu.memory_space<vmem>>, vector<1x32x32xf32>
    %218 = vector.shape_cast %217 : vector<1x32x32xf32> to vector<32x32xf32>
    %c1_109 = arith.constant 1 : index
    %c0_110 = arith.constant 0 : index
    %c0_111 = arith.constant 0 : index
    %219 = vector.load %arg8[%c1_109, %c0_110, %c0_111] : memref<2x1x32xf32, #tpu.memory_space<vmem>>, vector<1x1x32xf32>
    %220 = vector.shape_cast %219 : vector<1x1x32xf32> to vector<1x32xf32>
    %cst_112 = arith.constant dense<0.000000e+00> : vector<2x8x32xf32>
    %221 = tpu.matmul %216, %218, %cst_112 {dimension_numbers = #tpu.dot_dimension_numbers<[2], [0], [0, 1], [1], [0, 0, 0, 1, 1, 1], [], []>} : vector<2x8x32xf32>, vector<32x32xf32>, vector<2x8x32xf32> -> vector<2x8x32xf32>
    %222 = vector.shape_cast %220 : vector<1x32xf32> to vector<1x1x32xf32>
    %223 = vector.broadcast %222 : vector<1x1x32xf32> to vector<2x8x32xf32>
    %224 = arith.addf %221, %223 : vector<2x8x32xf32>
    %225 = arith.addf %170, %224 : vector<2x8x32xf32>
    %c1_113 = arith.constant 1 : index
    %c0_114 = arith.constant 0 : index
    %c0_115 = arith.constant 0 : index
    %226 = vector.load %arg9[%c1_113, %c0_114, %c0_115] : memref<2x1x32xf32, #tpu.memory_space<vmem>>, vector<1x1x32xf32>
    %227 = vector.shape_cast %226 : vector<1x1x32xf32> to vector<1x32xf32>
    %c1_116 = arith.constant 1 : index
    %c0_117 = arith.constant 0 : index
    %c0_118 = arith.constant 0 : index
    %228 = vector.load %arg10[%c1_116, %c0_117, %c0_118] : memref<2x1x32xf32, #tpu.memory_space<vmem>>, vector<1x1x32xf32>
    %229 = vector.shape_cast %228 : vector<1x1x32xf32> to vector<1x32xf32>
    %cst_119 = arith.constant dense<0.000000e+00> : vector<2x8xf32>
    %230 = vector.multi_reduction <add>, %225, %cst_119 [2] : vector<2x8x32xf32> to vector<2x8xf32>
    %231 = vector.shape_cast %230 : vector<2x8xf32> to vector<2x8x1xf32>
    %cst_120 = arith.constant 3.200000e+01 : f32
    %232 = vector.broadcast %cst_120 : f32 to vector<2x8x1xf32>
    %233 = arith.divf %231, %232 : vector<2x8x1xf32>
    %234 = vector.broadcast %233 : vector<2x8x1xf32> to vector<2x8x32xf32>
    %235 = arith.subf %225, %234 : vector<2x8x32xf32>
    %236 = arith.mulf %235, %235 : vector<2x8x32xf32>
    %cst_121 = arith.constant dense<0.000000e+00> : vector<2x8xf32>
    %237 = vector.multi_reduction <add>, %236, %cst_121 [2] : vector<2x8x32xf32> to vector<2x8xf32>
    %238 = vector.shape_cast %237 : vector<2x8xf32> to vector<2x8x1xf32>
    %cst_122 = arith.constant 3.200000e+01 : f32
    %239 = vector.broadcast %cst_122 : f32 to vector<2x8x1xf32>
    %240 = arith.divf %238, %239 : vector<2x8x1xf32>
    %241 = vector.broadcast %233 : vector<2x8x1xf32> to vector<2x8x32xf32>
    %242 = arith.subf %225, %241 : vector<2x8x32xf32>
    %cst_123 = arith.constant 9.99999996E-13 : f32
    %243 = vector.broadcast %cst_123 : f32 to vector<2x8x1xf32>
    %244 = arith.addf %240, %243 : vector<2x8x1xf32>
    %245 = math.rsqrt %244 : vector<2x8x1xf32>
    %246 = vector.broadcast %245 : vector<2x8x1xf32> to vector<2x8x32xf32>
    %247 = arith.mulf %242, %246 : vector<2x8x32xf32>
    %248 = vector.shape_cast %227 : vector<1x32xf32> to vector<1x1x32xf32>
    %249 = vector.broadcast %248 : vector<1x1x32xf32> to vector<2x8x32xf32>
    %250 = arith.mulf %247, %249 : vector<2x8x32xf32>
    %251 = vector.shape_cast %229 : vector<1x32xf32> to vector<1x1x32xf32>
    %252 = vector.broadcast %251 : vector<1x1x32xf32> to vector<2x8x32xf32>
    %253 = arith.addf %250, %252 : vector<2x8x32xf32>
    %c1_124 = arith.constant 1 : index
    %c0_125 = arith.constant 0 : index
    %c0_126 = arith.constant 0 : index
    %254 = vector.load %arg11[%c1_124, %c0_125, %c0_126] : memref<2x32x64xf32, #tpu.memory_space<vmem>>, vector<1x32x64xf32>
    %255 = vector.shape_cast %254 : vector<1x32x64xf32> to vector<32x64xf32>
    %c1_127 = arith.constant 1 : index
    %c0_128 = arith.constant 0 : index
    %c0_129 = arith.constant 0 : index
    %256 = vector.load %arg12[%c1_127, %c0_128, %c0_129] : memref<2x1x64xf32, #tpu.memory_space<vmem>>, vector<1x1x64xf32>
    %257 = vector.shape_cast %256 : vector<1x1x64xf32> to vector<1x64xf32>
    %cst_130 = arith.constant dense<0.000000e+00> : vector<2x8x64xf32>
    %258 = tpu.matmul %253, %255, %cst_130 {dimension_numbers = #tpu.dot_dimension_numbers<[2], [0], [0, 1], [1], [0, 0, 0, 1, 1, 1], [], []>} : vector<2x8x32xf32>, vector<32x64xf32>, vector<2x8x64xf32> -> vector<2x8x64xf32>
    %259 = vector.shape_cast %257 : vector<1x64xf32> to vector<1x1x64xf32>
    %260 = vector.broadcast %259 : vector<1x1x64xf32> to vector<2x8x64xf32>
    %261 = arith.addf %258, %260 : vector<2x8x64xf32>
    %262 = arith.mulf %261, %261 : vector<2x8x64xf32>
    %263 = arith.mulf %261, %262 : vector<2x8x64xf32>
    %cst_131 = arith.constant 4.471500e-02 : f32
    %264 = vector.broadcast %cst_131 : f32 to vector<2x8x64xf32>
    %265 = arith.mulf %264, %263 : vector<2x8x64xf32>
    %266 = arith.addf %261, %265 : vector<2x8x64xf32>
    %cst_132 = arith.constant 0.797884583 : f32
    %267 = vector.broadcast %cst_132 : f32 to vector<2x8x64xf32>
    %268 = arith.mulf %267, %266 : vector<2x8x64xf32>
    %269 = math.tanh %268 : vector<2x8x64xf32>
    %cst_133 = arith.constant 1.000000e+00 : f32
    %270 = vector.broadcast %cst_133 : f32 to vector<2x8x64xf32>
    %271 = arith.addf %270, %269 : vector<2x8x64xf32>
    %cst_134 = arith.constant 5.000000e-01 : f32
    %272 = vector.broadcast %cst_134 : f32 to vector<2x8x64xf32>
    %273 = arith.mulf %272, %271 : vector<2x8x64xf32>
    %274 = arith.mulf %261, %273 : vector<2x8x64xf32>
    %c1_135 = arith.constant 1 : index
    %c0_136 = arith.constant 0 : index
    %c0_137 = arith.constant 0 : index
    %275 = vector.load %arg13[%c1_135, %c0_136, %c0_137] : memref<2x64x32xf32, #tpu.memory_space<vmem>>, vector<1x64x32xf32>
    %276 = vector.shape_cast %275 : vector<1x64x32xf32> to vector<64x32xf32>
    %c1_138 = arith.constant 1 : index
    %c0_139 = arith.constant 0 : index
    %c0_140 = arith.constant 0 : index
    %277 = vector.load %arg14[%c1_138, %c0_139, %c0_140] : memref<2x1x32xf32, #tpu.memory_space<vmem>>, vector<1x1x32xf32>
    %278 = vector.shape_cast %277 : vector<1x1x32xf32> to vector<1x32xf32>
    %cst_141 = arith.constant dense<0.000000e+00> : vector<2x8x32xf32>
    %279 = tpu.matmul %274, %276, %cst_141 {dimension_numbers = #tpu.dot_dimension_numbers<[2], [0], [0, 1], [1], [0, 0, 0, 1, 1, 1], [], []>} : vector<2x8x64xf32>, vector<64x32xf32>, vector<2x8x32xf32> -> vector<2x8x32xf32>
    %280 = vector.shape_cast %278 : vector<1x32xf32> to vector<1x1x32xf32>
    %281 = vector.broadcast %280 : vector<1x1x32xf32> to vector<2x8x32xf32>
    %282 = arith.addf %279, %281 : vector<2x8x32xf32>
    %283 = arith.addf %253, %282 : vector<2x8x32xf32>
    %c1_142 = arith.constant 1 : index
    %c0_143 = arith.constant 0 : index
    %c0_144 = arith.constant 0 : index
    %284 = vector.load %arg15[%c1_142, %c0_143, %c0_144] : memref<2x1x32xf32, #tpu.memory_space<vmem>>, vector<1x1x32xf32>
    %285 = vector.shape_cast %284 : vector<1x1x32xf32> to vector<1x32xf32>
    %c1_145 = arith.constant 1 : index
    %c0_146 = arith.constant 0 : index
    %c0_147 = arith.constant 0 : index
    %286 = vector.load %arg16[%c1_145, %c0_146, %c0_147] : memref<2x1x32xf32, #tpu.memory_space<vmem>>, vector<1x1x32xf32>
    %287 = vector.shape_cast %286 : vector<1x1x32xf32> to vector<1x32xf32>
    %cst_148 = arith.constant dense<0.000000e+00> : vector<2x8xf32>
    %288 = vector.multi_reduction <add>, %283, %cst_148 [2] : vector<2x8x32xf32> to vector<2x8xf32>
    %289 = vector.shape_cast %288 : vector<2x8xf32> to vector<2x8x1xf32>
    %cst_149 = arith.constant 3.200000e+01 : f32
    %290 = vector.broadcast %cst_149 : f32 to vector<2x8x1xf32>
    %291 = arith.divf %289, %290 : vector<2x8x1xf32>
    %292 = vector.broadcast %291 : vector<2x8x1xf32> to vector<2x8x32xf32>
    %293 = arith.subf %283, %292 : vector<2x8x32xf32>
    %294 = arith.mulf %293, %293 : vector<2x8x32xf32>
    %cst_150 = arith.constant dense<0.000000e+00> : vector<2x8xf32>
    %295 = vector.multi_reduction <add>, %294, %cst_150 [2] : vector<2x8x32xf32> to vector<2x8xf32>
    %296 = vector.shape_cast %295 : vector<2x8xf32> to vector<2x8x1xf32>
    %cst_151 = arith.constant 3.200000e+01 : f32
    %297 = vector.broadcast %cst_151 : f32 to vector<2x8x1xf32>
    %298 = arith.divf %296, %297 : vector<2x8x1xf32>
    %299 = vector.broadcast %291 : vector<2x8x1xf32> to vector<2x8x32xf32>
    %300 = arith.subf %283, %299 : vector<2x8x32xf32>
    %cst_152 = arith.constant 9.99999996E-13 : f32
    %301 = vector.broadcast %cst_152 : f32 to vector<2x8x1xf32>
    %302 = arith.addf %298, %301 : vector<2x8x1xf32>
    %303 = math.rsqrt %302 : vector<2x8x1xf32>
    %304 = vector.broadcast %303 : vector<2x8x1xf32> to vector<2x8x32xf32>
    %305 = arith.mulf %300, %304 : vector<2x8x32xf32>
    %306 = vector.shape_cast %285 : vector<1x32xf32> to vector<1x1x32xf32>
    %307 = vector.broadcast %306 : vector<1x1x32xf32> to vector<2x8x32xf32>
    %308 = arith.mulf %305, %307 : vector<2x8x32xf32>
    %309 = vector.shape_cast %287 : vector<1x32xf32> to vector<1x1x32xf32>
    %310 = vector.broadcast %309 : vector<1x1x32xf32> to vector<2x8x32xf32>
    %311 = arith.addf %308, %310 : vector<2x8x32xf32>
    %312 = vector.extract_strided_slice %311 {offsets = [0, 0, 0], sizes = [2, 1, 32], strides = [1, 1, 1]} : vector<2x8x32xf32> to vector<2x1x32xf32>
    %c0_153 = arith.constant 0 : index
    %c0_154 = arith.constant 0 : index
    %313 = vector.load %arg17[%c0_153, %c0_154] : memref<32x32xf32, #tpu.memory_space<vmem>>, vector<32x32xf32>
    %c0_155 = arith.constant 0 : index
    %c0_156 = arith.constant 0 : index
    %314 = vector.load %arg18[%c0_155, %c0_156] : memref<1x32xf32, #tpu.memory_space<vmem>>, vector<1x32xf32>
    %cst_157 = arith.constant dense<0.000000e+00> : vector<2x1x32xf32>
    %315 = tpu.matmul %312, %313, %cst_157 {dimension_numbers = #tpu.dot_dimension_numbers<[2], [0], [0, 1], [1], [0, 0, 0, 1, 1, 1], [], []>} : vector<2x1x32xf32>, vector<32x32xf32>, vector<2x1x32xf32> -> vector<2x1x32xf32>
    %316 = vector.shape_cast %314 : vector<1x32xf32> to vector<1x1x32xf32>
    %317 = vector.broadcast %316 : vector<1x1x32xf32> to vector<2x1x32xf32>
    %318 = arith.addf %315, %317 : vector<2x1x32xf32>
    %319 = math.tanh %318 : vector<2x1x32xf32>
    %c0_158 = arith.constant 0 : index
    %c0_159 = arith.constant 0 : index
    %320 = vector.load %arg19[%c0_158, %c0_159] : memref<32x128xf32, #tpu.memory_space<vmem>>, vector<32x128xf32>
    %c0_160 = arith.constant 0 : index
    %c0_161 = arith.constant 0 : index
    %321 = vector.load %arg20[%c0_160, %c0_161] : memref<1x128xf32, #tpu.memory_space<vmem>>, vector<1x128xf32>
    %cst_162 = arith.constant dense<0.000000e+00> : vector<2x1x128xf32>
    %322 = tpu.matmul %319, %320, %cst_162 {dimension_numbers = #tpu.dot_dimension_numbers<[2], [0], [0, 1], [1], [0, 0, 0, 1, 1, 1], [], []>} : vector<2x1x32xf32>, vector<32x128xf32>, vector<2x1x128xf32> -> vector<2x1x128xf32>
    %323 = vector.shape_cast %321 : vector<1x128xf32> to vector<1x1x128xf32>
    %324 = vector.broadcast %323 : vector<1x1x128xf32> to vector<2x1x128xf32>
    %325 = arith.addf %322, %324 : vector<2x1x128xf32>
    %c0_163 = arith.constant 0 : index
    %c0_164 = arith.constant 0 : index
    %c0_165 = arith.constant 0 : index
    %326 = vector.load %arg21[%c0_163, %c0_164, %c0_165] : memref<2x1x128xf32, #tpu.memory_space<vmem>>, vector<2x1x128xf32>
    tpu.vector_store %arg21[%c0_163, %c0_164, %c0_165], %325 {strides = array<i32>} : memref<2x1x128xf32, #tpu.memory_space<vmem>>, vector<2x1x128xf32>,
    return
  }
  func.func @transform_0(%arg0: i32) -> (i32, i32, i32) {
    %c0_i32 = arith.constant 0 : i32
    %c0_i32_0 = arith.constant 0 : i32
    %c0_i32_1 = arith.constant 0 : i32
    return %arg0, %c0_i32, %c0_i32_0 : i32, i32, i32
  }
  func.func @transform_1(%arg0: i32) -> (i32, i32, i32) {
    %c0_i32 = arith.constant 0 : i32
    %c0_i32_0 = arith.constant 0 : i32
    %c0_i32_1 = arith.constant 0 : i32
    return %arg0, %c0_i32, %c0_i32_0 : i32, i32, i32
  }
  func.func @transform_2(%arg0: i32) -> (i32, i32) {
    %c0_i32 = arith.constant 0 : i32
    %c0_i32_0 = arith.constant 0 : i32
    %c0_i32_1 = arith.constant 0 : i32
    return %c0_i32, %c0_i32_0 : i32, i32
  }
  func.func @transform_3(%arg0: i32) -> (i32, i32) {
    %c0_i32 = arith.constant 0 : i32
    %c0_i32_0 = arith.constant 0 : i32
    %c0_i32_1 = arith.constant 0 : i32
    return %c0_i32, %c0_i32_0 : i32, i32
  }
  func.func @transform_4(%arg0: i32) -> (i32, i32, i32) {
    %c0_i32 = arith.constant 0 : i32
    %c0_i32_0 = arith.constant 0 : i32
    %c0_i32_1 = arith.constant 0 : i32
    %c0_i32_2 = arith.constant 0 : i32
    return %c0_i32, %c0_i32_0, %c0_i32_1 : i32, i32, i32
  }
  func.func @transform_5(%arg0: i32) -> (i32, i32, i32) {
    %c0_i32 = arith.constant 0 : i32
    %c0_i32_0 = arith.constant 0 : i32
    %c0_i32_1 = arith.constant 0 : i32
    %c0_i32_2 = arith.constant 0 : i32
    return %c0_i32, %c0_i32_0, %c0_i32_1 : i32, i32, i32
  }
  func.func @transform_6(%arg0: i32) -> (i32, i32, i32) {
    %c0_i32 = arith.constant 0 : i32
    %c0_i32_0 = arith.constant 0 : i32
    %c0_i32_1 = arith.constant 0 : i32
    %c0_i32_2 = arith.constant 0 : i32
    return %c0_i32, %c0_i32_0, %c0_i32_1 : i32, i32, i32
  }
  func.func @transform_7(%arg0: i32) -> (i32, i32, i32) {
    %c0_i32 = arith.constant 0 : i32
    %c0_i32_0 = arith.constant 0 : i32
    %c0_i32_1 = arith.constant 0 : i32
    %c0_i32_2 = arith.constant 0 : i32
    return %c0_i32, %c0_i32_0, %c0_i32_1 : i32, i32, i32
  }
  func.func @transform_8(%arg0: i32) -> (i32, i32, i32) {
    %c0_i32 = arith.constant 0 : i32
    %c0_i32_0 = arith.constant 0 : i32
    %c0_i32_1 = arith.constant 0 : i32
    %c0_i32_2 = arith.constant 0 : i32
    return %c0_i32, %c0_i32_0, %c0_i32_1 : i32, i32, i32
  }
  func.func @transform_9(%arg0: i32) -> (i32, i32, i32) {
    %c0_i32 = arith.constant 0 : i32
    %c0_i32_0 = arith.constant 0 : i32
    %c0_i32_1 = arith.constant 0 : i32
    %c0_i32_2 = arith.constant 0 : i32
    return %c0_i32, %c0_i32_0, %c0_i32_1 : i32, i32, i32
  }
  func.func @transform_10(%arg0: i32) -> (i32, i32, i32) {
    %c0_i32 = arith.constant 0 : i32
    %c0_i32_0 = arith.constant 0 : i32
    %c0_i32_1 = arith.constant 0 : i32
    %c0_i32_2 = arith.constant 0 : i32
    return %c0_i32, %c0_i32_0, %c0_i32_1 : i32, i32, i32
  }
  func.func @transform_11(%arg0: i32) -> (i32, i32, i32) {
    %c0_i32 = arith.constant 0 : i32
    %c0_i32_0 = arith.constant 0 : i32
    %c0_i32_1 = arith.constant 0 : i32
    %c0_i32_2 = arith.constant 0 : i32
    return %c0_i32, %c0_i32_0, %c0_i32_1 : i32, i32, i32
  }
  func.func @transform_12(%arg0: i32) -> (i32, i32, i32) {
    %c0_i32 = arith.constant 0 : i32
    %c0_i32_0 = arith.constant 0 : i32
    %c0_i32_1 = arith.constant 0 : i32
    %c0_i32_2 = arith.constant 0 : i32
    return %c0_i32, %c0_i32_0, %c0_i32_1 : i32, i32, i32
  }
  func.func @transform_13(%arg0: i32) -> (i32, i32, i32) {
    %c0_i32 = arith.constant 0 : i32
    %c0_i32_0 = arith.constant 0 : i32
    %c0_i32_1 = arith.constant 0 : i32
    %c0_i32_2 = arith.constant 0 : i32
    return %c0_i32, %c0_i32_0, %c0_i32_1 : i32, i32, i32
  }
  func.func @transform_14(%arg0: i32) -> (i32, i32, i32) {
    %c0_i32 = arith.constant 0 : i32
    %c0_i32_0 = arith.constant 0 : i32
    %c0_i32_1 = arith.constant 0 : i32
    %c0_i32_2 = arith.constant 0 : i32
    return %c0_i32, %c0_i32_0, %c0_i32_1 : i32, i32, i32
  }
  func.func @transform_15(%arg0: i32) -> (i32, i32, i32) {
    %c0_i32 = arith.constant 0 : i32
    %c0_i32_0 = arith.constant 0 : i32
    %c0_i32_1 = arith.constant 0 : i32
    %c0_i32_2 = arith.constant 0 : i32
    return %c0_i32, %c0_i32_0, %c0_i32_1 : i32, i32, i32
  }
  func.func @transform_16(%arg0: i32) -> (i32, i32) {
    %c0_i32 = arith.constant 0 : i32
    %c0_i32_0 = arith.constant 0 : i32
    %c0_i32_1 = arith.constant 0 : i32
    return %c0_i32, %c0_i32_0 : i32, i32
  }
  func.func @transform_17(%arg0: i32) -> (i32, i32) {
    %c0_i32 = arith.constant 0 : i32
    %c0_i32_0 = arith.constant 0 : i32
    %c0_i32_1 = arith.constant 0 : i32
    return %c0_i32, %c0_i32_0 : i32, i32
  }
  func.func @transform_18(%arg0: i32) -> (i32, i32) {
    %c0_i32 = arith.constant 0 : i32
    %c0_i32_0 = arith.constant 0 : i32
    %c0_i32_1 = arith.constant 0 : i32
    return %c0_i32, %c0_i32_0 : i32, i32
  }
  func.func @transform_19(%arg0: i32) -> (i32, i32) {
    %c0_i32 = arith.constant 0 : i32
    %c0_i32_0 = arith.constant 0 : i32
    %c0_i32_1 = arith.constant 0 : i32
    return %c0_i32, %c0_i32_0 : i32, i32
  }
  func.func @transform_20(%arg0: i32) -> (i32, i32, i32) {
    %c0_i32 = arith.constant 0 : i32
    %c0_i32_0 = arith.constant 0 : i32
    %c0_i32_1 = arith.constant 0 : i32
    return %arg0, %c0_i32, %c0_i32_0 : i32, i32, i32
  }
}

</mosaic_0001>

<llo_original>
// kernel: big_model_forward.1
$region0: #{big_model_forward.1}
  #allocation0 [shape = 'u32[]', space=smem, size = 0x4, offset = 0x4, fixed_abs, tag = 'smem constant byte address 0x4 - core index']
  #allocation1 [shape = 'u32[72,128]{1,0:T(1,128)}', space=vmem, size = 0x9000, scoped, tag = 'internal scratch']
  #allocation2 [shape = 'f32[2,8,32]{2,1,0:T(8,128)}', space=vmem, size = 0x2000, scoped, tag = 'scratch operand']
  %s0 = inlined_call_operand.vmem [shape: f32[4,8,32], index: 0, kind: input, shape index: {}]
  %s1 = inlined_call_operand.vmem [shape: f32[4,1,8], index: 1, kind: input, shape index: {}]
  %s2 = inlined_call_operand.vmem [shape: f32[1,32], index: 2, kind: input, shape index: {}]
  %s3 = inlined_call_operand.vmem [shape: f32[1,32], index: 3, kind: input, shape index: {}, may-alias: {3,17}]
  %s4 = inlined_call_operand.vmem [shape: f32[2,32,96], index: 4, kind: input, shape index: {}]
  %s5 = inlined_call_operand.vmem [shape: f32[2,1,96], index: 5, kind: input, shape index: {}]
  %s6 = inlined_call_operand.vmem [shape: f32[2,32,32], index: 6, kind: input, shape index: {}]
  %s7 = inlined_call_operand.vmem [shape: f32[2,1,32], index: 7, kind: input, shape index: {}, may-alias: {7,9,13,15}]
  %s8 = inlined_call_operand.vmem [shape: f32[2,1,32], index: 8, kind: input, shape index: {}, may-alias: {8,14}]
  %s9 = inlined_call_operand.vmem [shape: f32[2,1,32], index: 9, kind: input, shape index: {}, may-alias: {7,9,13,15}]
  %s10 = inlined_call_operand.vmem [shape: f32[2,32,64], index: 10, kind: input, shape index: {}]
  %s11 = inlined_call_operand.vmem [shape: f32[2,1,64], index: 11, kind: input, shape index: {}]
  %s12 = inlined_call_operand.vmem [shape: f32[2,64,32], index: 12, kind: input, shape index: {}]
  %s13 = inlined_call_operand.vmem [shape: f32[2,1,32], index: 13, kind: input, shape index: {}, may-alias: {7,9,13,15}]
  %s14 = inlined_call_operand.vmem [shape: f32[2,1,32], index: 14, kind: input, shape index: {}, may-alias: {8,14}]
  %s15 = inlined_call_operand.vmem [shape: f32[2,1,32], index: 15, kind: input, shape index: {}, may-alias: {7,9,13,15}]
  %s16 = inlined_call_operand.vmem [shape: f32[32,32], index: 16, kind: input, shape index: {}]
  %s17 = inlined_call_operand.vmem [shape: f32[1,32], index: 17, kind: input, shape index: {}, may-alias: {3,17}]
  %s18 = inlined_call_operand.vmem [shape: f32[32,128], index: 18, kind: input, shape index: {}]
  %s19 = inlined_call_operand.vmem [shape: f32[1,128], index: 19, kind: input, shape index: {}]
  %s20 = inlined_call_operand.hbm [shape: f32[4,1,128], index: 20, kind: output, shape index: {}]
  %s21 = sld [smem:[#allocation0]]
  $region113: #{big_model_forward.1} parent=0
    _
  %s23 = ssub.s32 1, %s21
  %s24 = scalar_select 0, %s23, %s21
  $region1: #{big_model_forward.1} parent=0
    #allocation3 [shape = 'u8[2048]{0}', space=vmem, size = 0x800, scoped, tag = 'output window, operand 0']
    #allocation4 [shape = 's32[2]{0}', space=sflag, size = 0x8, scoped, tag = 'scoped memory for big_model_forward.1']
    %25 = vsyncpa [#allocation4], 0
    %s26 = scalar_lea.sflag [#allocation4], 1
    %27 = vsyncpa %s26, 0
    loop: start=0, step=1, limit=4
    $region2: #{big_model_forward.1} parent=1 // loop_pre_header
      _
    $region3: #{big_model_forward.1} parent=1 // loop_header
      %s29 = sphi 0, %s33
      %p30 = scmp.ge.s32.totalorder %s29, 4
      %s39 = sphi 0, %s41
      %s42 = sphi 0, %s39
      %s43 = sphi 0, %s42
      %s59 = sphi 0, %s43
      %s65 = sphi 0, %s67
      %s68 = sphi 0, %s65
      %s69 = sphi 0, %s68
      %s85 = sphi 0, %s69
      %s89 = sphi 0, %s89
      %s91 = sphi 0, %s89
      %s92 = sphi 0, %s91
      %s106 = sphi 0, %s92
      %s110 = sphi 0, %s110
      %s112 = sphi 0, %s110
      %s113 = sphi 0, %s112
      %s127 = sphi 0, %s113
      %s131 = sphi 0, %s131
      %s133 = sphi 0, %s131
      %s134 = sphi 0, %s133
      %s148 = sphi 0, %s134
      %s152 = sphi 0, %s152
      %s154 = sphi 0, %s152
      %s155 = sphi 0, %s154
      %s169 = sphi 0, %s155
      %s173 = sphi 0, %s173
      %s175 = sphi 0, %s173
      %s176 = sphi 0, %s175
      %s190 = sphi 0, %s176
      %s194 = sphi 0, %s194
      %s196 = sphi 0, %s194
      %s197 = sphi 0, %s196
      %s211 = sphi 0, %s197
      %s215 = sphi 0, %s215
      %s217 = sphi 0, %s215
      %s218 = sphi 0, %s217
      %s232 = sphi 0, %s218
      %s236 = sphi 0, %s236
      %s238 = sphi 0, %s236
      %s239 = sphi 0, %s238
      %s253 = sphi 0, %s239
      %s257 = sphi 0, %s257
      %s259 = sphi 0, %s257
      %s260 = sphi 0, %s259
      %s274 = sphi 0, %s260
      %s278 = sphi 0, %s278
      %s280 = sphi 0, %s278
      %s281 = sphi 0, %s280
      %s295 = sphi 0, %s281
      %s299 = sphi 0, %s299
      %s301 = sphi 0, %s299
      %s302 = sphi 0, %s301
      %s316 = sphi 0, %s302
      %s320 = sphi 0, %s320
      %s322 = sphi 0, %s320
      %s323 = sphi 0, %s322
      %s337 = sphi 0, %s323
      %s341 = sphi 0, %s341
      %s343 = sphi 0, %s341
      %s344 = sphi 0, %s343
      %s358 = sphi 0, %s344
      %s362 = sphi 0, %s362
      %s364 = sphi 0, %s362
      %s365 = sphi 0, %s364
      %s379 = sphi 0, %s365
      %s383 = sphi 0, %s383
      %s385 = sphi 0, %s383
      %s386 = sphi 0, %s385
      %s400 = sphi 0, %s386
      %s404 = sphi 0, %s404
      %s406 = sphi 0, %s404
      %s407 = sphi 0, %s406
      %s421 = sphi 0, %s407
      %s425 = sphi 0, %s425
      %s427 = sphi 0, %s425
      %s428 = sphi 0, %s427
      %s442 = sphi 0, %s428
      %s446 = sphi 0, %s446
      %s448 = sphi 0, %s446
      %s449 = sphi 0, %s448
      %s463 = sphi 0, %s449
      %s469 = sphi 0, %s471
      %s472 = sphi 0, %s469
      %s473 = sphi 0, %s472
      %s489 = sphi 0, %s473
    $region4: #{big_model_forward.1} parent=1 // loop_header_branch
      %32 = sbr.rel (%p30) target = $region8
    $region5: #{big_model_forward.1} parent=1 // loop_body
      %s34 = ssub.s32 %s29, 1
      %s35 = ssub.s32 %s29, 2
      %s36 = sadd.s32 %s29, 1
      %s37 = ssub.s32 %s29, %s36
      %p38 = scmp.eq.s32.totalorder %s37, 0
      %s40 = sadd.s32 %s39, 1
      %s41 = scalar_select %p38, %s39, %s40
      %p44 = pneg %p38
      %p45 = scmp.eq.s32.totalorder %s29, 1
      %p46 = por %p44, %p45
      %p47 = scmp.ne.s32.totalorder %s39, %s42
      %p48 = scmp.eq.s32.totalorder %s29, 0
      %p49 = por %p47, %p48
      %p50 = scmp.ne.s32.totalorder %s39, %s42
      %p51 = scmp.eq.s32.totalorder %s34, 1
      %p52 = por %p50, %p51
      %p53 = scmp.ne.s32.totalorder %s42, %s43
      %p54 = scmp.eq.s32.totalorder %s34, 0
      %p55 = por %p53, %p54
      %p56 = scmp.ne.s32.totalorder %s42, %s43
      %p57 = scmp.eq.s32.totalorder %s35, 1
      %p58 = por %p56, %p57
      %p60 = scmp.ne.s32.totalorder %s43, %s59
      %p61 = scmp.eq.s32.totalorder %s35, 0
      %p62 = por %p60, %p61
      %s63 = ssub.s32 %s29, %s36
      %p64 = scmp.eq.s32.totalorder %s63, 0
      %s66 = sadd.s32 %s65, 1
      %s67 = scalar_select %p64, %s65, %s66
      %p70 = pneg %p64
      %p71 = scmp.eq.s32.totalorder %s29, 1
      %p72 = por %p70, %p71
      %p73 = scmp.ne.s32.totalorder %s65, %s68
      %p74 = scmp.eq.s32.totalorder %s29, 0
      %p75 = por %p73, %p74
      %p76 = scmp.ne.s32.totalorder %s65, %s68
      %p77 = scmp.eq.s32.totalorder %s34, 1
      %p78 = por %p76, %p77
      %p79 = scmp.ne.s32.totalorder %s68, %s69
      %p80 = scmp.eq.s32.totalorder %s34, 0
      %p81 = por %p79, %p80
      %p82 = scmp.ne.s32.totalorder %s68, %s69
      %p83 = scmp.eq.s32.totalorder %s35, 1
      %p84 = por %p82, %p83
      %p86 = scmp.ne.s32.totalorder %s69, %s85
      %p87 = scmp.eq.s32.totalorder %s35, 0
      %p88 = por %p86, %p87
      %s90 = sadd.s32 %s89, 1
      %p93 = scmp.eq.s32.totalorder %s29, 1
      %p94 = scmp.ne.s32.totalorder %s89, %s91
      %p95 = scmp.eq.s32.totalorder %s29, 0
      %p96 = por %p94, %p95
      %p97 = scmp.ne.s32.totalorder %s89, %s91
      %p98 = scmp.eq.s32.totalorder %s34, 1
      %p99 = por %p97, %p98
      %p100 = scmp.ne.s32.totalorder %s91, %s92
      %p101 = scmp.eq.s32.totalorder %s34, 0
      %p102 = por %p100, %p101
      %p103 = scmp.ne.s32.totalorder %s91, %s92
      %p104 = scmp.eq.s32.totalorder %s35, 1
      %p105 = por %p103, %p104
      %p107 = scmp.ne.s32.totalorder %s92, %s106
      %p108 = scmp.eq.s32.totalorder %s35, 0
      %p109 = por %p107, %p108
      %s111 = sadd.s32 %s110, 1
      %p114 = scmp.eq.s32.totalorder %s29, 1
      %p115 = scmp.ne.s32.totalorder %s110, %s112
      %p116 = scmp.eq.s32.totalorder %s29, 0
      %p117 = por %p115, %p116
      %p118 = scmp.ne.s32.totalorder %s110, %s112
      %p119 = scmp.eq.s32.totalorder %s34, 1
      %p120 = por %p118, %p119
      %p121 = scmp.ne.s32.totalorder %s112, %s113
      %p122 = scmp.eq.s32.totalorder %s34, 0
      %p123 = por %p121, %p122
      %p124 = scmp.ne.s32.totalorder %s112, %s113
      %p125 = scmp.eq.s32.totalorder %s35, 1
      %p126 = por %p124, %p125
      %p128 = scmp.ne.s32.totalorder %s113, %s127
      %p129 = scmp.eq.s32.totalorder %s35, 0
      %p130 = por %p128, %p129
      %s132 = sadd.s32 %s131, 1
      %p135 = scmp.eq.s32.totalorder %s29, 1
      %p136 = scmp.ne.s32.totalorder %s131, %s133
      %p137 = scmp.eq.s32.totalorder %s29, 0
      %p138 = por %p136, %p137
      %p139 = scmp.ne.s32.totalorder %s131, %s133
      %p140 = scmp.eq.s32.totalorder %s34, 1
      %p141 = por %p139, %p140
      %p142 = scmp.ne.s32.totalorder %s133, %s134
      %p143 = scmp.eq.s32.totalorder %s34, 0
      %p144 = por %p142, %p143
      %p145 = scmp.ne.s32.totalorder %s133, %s134
      %p146 = scmp.eq.s32.totalorder %s35, 1
      %p147 = por %p145, %p146
      %p149 = scmp.ne.s32.totalorder %s134, %s148
      %p150 = scmp.eq.s32.totalorder %s35, 0
      %p151 = por %p149, %p150
      %s153 = sadd.s32 %s152, 1
      %p156 = scmp.eq.s32.totalorder %s29, 1
      %p157 = scmp.ne.s32.totalorder %s152, %s154
      %p158 = scmp.eq.s32.totalorder %s29, 0
      %p159 = por %p157, %p158
      %p160 = scmp.ne.s32.totalorder %s152, %s154
      %p161 = scmp.eq.s32.totalorder %s34, 1
      %p162 = por %p160, %p161
      %p163 = scmp.ne.s32.totalorder %s154, %s155
      %p164 = scmp.eq.s32.totalorder %s34, 0
      %p165 = por %p163, %p164
      %p166 = scmp.ne.s32.totalorder %s154, %s155
      %p167 = scmp.eq.s32.totalorder %s35, 1
      %p168 = por %p166, %p167
      %p170 = scmp.ne.s32.totalorder %s155, %s169
      %p171 = scmp.eq.s32.totalorder %s35, 0
      %p172 = por %p170, %p171
      %s174 = sadd.s32 %s173, 1
      %p177 = scmp.eq.s32.totalorder %s29, 1
      %p178 = scmp.ne.s32.totalorder %s173, %s175
      %p179 = scmp.eq.s32.totalorder %s29, 0
      %p180 = por %p178, %p179
      %p181 = scmp.ne.s32.totalorder %s173, %s175
      %p182 = scmp.eq.s32.totalorder %s34, 1
      %p183 = por %p181, %p182
      %p184 = scmp.ne.s32.totalorder %s175, %s176
      %p185 = scmp.eq.s32.totalorder %s34, 0
      %p186 = por %p184, %p185
      %p187 = scmp.ne.s32.totalorder %s175, %s176
      %p188 = scmp.eq.s32.totalorder %s35, 1
      %p189 = por %p187, %p188
      %p191 = scmp.ne.s32.totalorder %s176, %s190
      %p192 = scmp.eq.s32.totalorder %s35, 0
      %p193 = por %p191, %p192
      %s195 = sadd.s32 %s194, 1
      %p198 = scmp.eq.s32.totalorder %s29, 1
      %p199 = scmp.ne.s32.totalorder %s194, %s196
      %p200 = scmp.eq.s32.totalorder %s29, 0
      %p201 = por %p199, %p200
      %p202 = scmp.ne.s32.totalorder %s194, %s196
      %p203 = scmp.eq.s32.totalorder %s34, 1
      %p204 = por %p202, %p203
      %p205 = scmp.ne.s32.totalorder %s196, %s197
      %p206 = scmp.eq.s32.totalorder %s34, 0
      %p207 = por %p205, %p206
      %p208 = scmp.ne.s32.totalorder %s196, %s197
      %p209 = scmp.eq.s32.totalorder %s35, 1
      %p210 = por %p208, %p209
      %p212 = scmp.ne.s32.totalorder %s197, %s211
      %p213 = scmp.eq.s32.totalorder %s35, 0
      %p214 = por %p212, %p213
      %s216 = sadd.s32 %s215, 1
      %p219 = scmp.eq.s32.totalorder %s29, 1
      %p220 = scmp.ne.s32.totalorder %s215, %s217
      %p221 = scmp.eq.s32.totalorder %s29, 0
      %p222 = por %p220, %p221
      %p223 = scmp.ne.s32.totalorder %s215, %s217
      %p224 = scmp.eq.s32.totalorder %s34, 1
      %p225 = por %p223, %p224
      %p226 = scmp.ne.s32.totalorder %s217, %s218
      %p227 = scmp.eq.s32.totalorder %s34, 0
      %p228 = por %p226, %p227
      %p229 = scmp.ne.s32.totalorder %s217, %s218
      %p230 = scmp.eq.s32.totalorder %s35, 1
      %p231 = por %p229, %p230
      %p233 = scmp.ne.s32.totalorder %s218, %s232
      %p234 = scmp.eq.s32.totalorder %s35, 0
      %p235 = por %p233, %p234
      %s237 = sadd.s32 %s236, 1
      %p240 = scmp.eq.s32.totalorder %s29, 1
      %p241 = scmp.ne.s32.totalorder %s236, %s238
      %p242 = scmp.eq.s32.totalorder %s29, 0
      %p243 = por %p241, %p242
      %p244 = scmp.ne.s32.totalorder %s236, %s238
      %p245 = scmp.eq.s32.totalorder %s34, 1
      %p246 = por %p244, %p245
      %p247 = scmp.ne.s32.totalorder %s238, %s239
      %p248 = scmp.eq.s32.totalorder %s34, 0
      %p249 = por %p247, %p248
      %p250 = scmp.ne.s32.totalorder %s238, %s239
      %p251 = scmp.eq.s32.totalorder %s35, 1
      %p252 = por %p250, %p251
      %p254 = scmp.ne.s32.totalorder %s239, %s253
      %p255 = scmp.eq.s32.totalorder %s35, 0
      %p256 = por %p254, %p255
      %s258 = sadd.s32 %s257, 1
      %p261 = scmp.eq.s32.totalorder %s29, 1
      %p262 = scmp.ne.s32.totalorder %s257, %s259
      %p263 = scmp.eq.s32.totalorder %s29, 0
      %p264 = por %p262, %p263
      %p265 = scmp.ne.s32.totalorder %s257, %s259
      %p266 = scmp.eq.s32.totalorder %s34, 1
      %p267 = por %p265, %p266
      %p268 = scmp.ne.s32.totalorder %s259, %s260
      %p269 = scmp.eq.s32.totalorder %s34, 0
      %p270 = por %p268, %p269
      %p271 = scmp.ne.s32.totalorder %s259, %s260
      %p272 = scmp.eq.s32.totalorder %s35, 1
      %p273 = por %p271, %p272
      %p275 = scmp.ne.s32.totalorder %s260, %s274
      %p276 = scmp.eq.s32.totalorder %s35, 0
      %p277 = por %p275, %p276
      %s279 = sadd.s32 %s278, 1
      %p282 = scmp.eq.s32.totalorder %s29, 1
      %p283 = scmp.ne.s32.totalorder %s278, %s280
      %p284 = scmp.eq.s32.totalorder %s29, 0
      %p285 = por %p283, %p284
      %p286 = scmp.ne.s32.totalorder %s278, %s280
      %p287 = scmp.eq.s32.totalorder %s34, 1
      %p288 = por %p286, %p287
      %p289 = scmp.ne.s32.totalorder %s280, %s281
      %p290 = scmp.eq.s32.totalorder %s34, 0
      %p291 = por %p289, %p290
      %p292 = scmp.ne.s32.totalorder %s280, %s281
      %p293 = scmp.eq.s32.totalorder %s35, 1
      %p294 = por %p292, %p293
      %p296 = scmp.ne.s32.totalorder %s281, %s295
      %p297 = scmp.eq.s32.totalorder %s35, 0
      %p298 = por %p296, %p297
      %s300 = sadd.s32 %s299, 1
      %p303 = scmp.eq.s32.totalorder %s29, 1
      %p304 = scmp.ne.s32.totalorder %s299, %s301
      %p305 = scmp.eq.s32.totalorder %s29, 0
      %p306 = por %p304, %p305
      %p307 = scmp.ne.s32.totalorder %s299, %s301
      %p308 = scmp.eq.s32.totalorder %s34, 1
      %p309 = por %p307, %p308
      %p310 = scmp.ne.s32.totalorder %s301, %s302
      %p311 = scmp.eq.s32.totalorder %s34, 0
      %p312 = por %p310, %p311
      %p313 = scmp.ne.s32.totalorder %s301, %s302
      %p314 = scmp.eq.s32.totalorder %s35, 1
      %p315 = por %p313, %p314
      %p317 = scmp.ne.s32.totalorder %s302, %s316
      %p318 = scmp.eq.s32.totalorder %s35, 0
      %p319 = por %p317, %p318
      %s321 = sadd.s32 %s320, 1
      %p324 = scmp.eq.s32.totalorder %s29, 1
      %p325 = scmp.ne.s32.totalorder %s320, %s322
      %p326 = scmp.eq.s32.totalorder %s29, 0
      %p327 = por %p325, %p326
      %p328 = scmp.ne.s32.totalorder %s320, %s322
      %p329 = scmp.eq.s32.totalorder %s34, 1
      %p330 = por %p328, %p329
      %p331 = scmp.ne.s32.totalorder %s322, %s323
      %p332 = scmp.eq.s32.totalorder %s34, 0
      %p333 = por %p331, %p332
      %p334 = scmp.ne.s32.totalorder %s322, %s323
      %p335 = scmp.eq.s32.totalorder %s35, 1
      %p336 = por %p334, %p335
      %p338 = scmp.ne.s32.totalorder %s323, %s337
      %p339 = scmp.eq.s32.totalorder %s35, 0
      %p340 = por %p338, %p339
      %s342 = sadd.s32 %s341, 1
      %p345 = scmp.eq.s32.totalorder %s29, 1
      %p346 = scmp.ne.s32.totalorder %s341, %s343
      %p347 = scmp.eq.s32.totalorder %s29, 0
      %p348 = por %p346, %p347
      %p349 = scmp.ne.s32.totalorder %s341, %s343
      %p350 = scmp.eq.s32.totalorder %s34, 1
      %p351 = por %p349, %p350
      %p352 = scmp.ne.s32.totalorder %s343, %s344
      %p353 = scmp.eq.s32.totalorder %s34, 0
      %p354 = por %p352, %p353
      %p355 = scmp.ne.s32.totalorder %s343, %s344
      %p356 = scmp.eq.s32.totalorder %s35, 1
      %p357 = por %p355, %p356
      %p359 = scmp.ne.s32.totalorder %s344, %s358
      %p360 = scmp.eq.s32.totalorder %s35, 0
      %p361 = por %p359, %p360
      %s363 = sadd.s32 %s362, 1
      %p366 = scmp.eq.s32.totalorder %s29, 1
      %p367 = scmp.ne.s32.totalorder %s362, %s364
      %p368 = scmp.eq.s32.totalorder %s29, 0
      %p369 = por %p367, %p368
      %p370 = scmp.ne.s32.totalorder %s362, %s364
      %p371 = scmp.eq.s32.totalorder %s34, 1
      %p372 = por %p370, %p371
      %p373 = scmp.ne.s32.totalorder %s364, %s365
      %p374 = scmp.eq.s32.totalorder %s34, 0
      %p375 = por %p373, %p374
      %p376 = scmp.ne.s32.totalorder %s364, %s365
      %p377 = scmp.eq.s32.totalorder %s35, 1
      %p378 = por %p376, %p377
      %p380 = scmp.ne.s32.totalorder %s365, %s379
      %p381 = scmp.eq.s32.totalorder %s35, 0
      %p382 = por %p380, %p381
      %s384 = sadd.s32 %s383, 1
      %p387 = scmp.eq.s32.totalorder %s29, 1
      %p388 = scmp.ne.s32.totalorder %s383, %s385
      %p389 = scmp.eq.s32.totalorder %s29, 0
      %p390 = por %p388, %p389
      %p391 = scmp.ne.s32.totalorder %s383, %s385
      %p392 = scmp.eq.s32.totalorder %s34, 1
      %p393 = por %p391, %p392
      %p394 = scmp.ne.s32.totalorder %s385, %s386
      %p395 = scmp.eq.s32.totalorder %s34, 0
      %p396 = por %p394, %p395
      %p397 = scmp.ne.s32.totalorder %s385, %s386
      %p398 = scmp.eq.s32.totalorder %s35, 1
      %p399 = por %p397, %p398
      %p401 = scmp.ne.s32.totalorder %s386, %s400
      %p402 = scmp.eq.s32.totalorder %s35, 0
      %p403 = por %p401, %p402
      %s405 = sadd.s32 %s404, 1
      %p408 = scmp.eq.s32.totalorder %s29, 1
      %p409 = scmp.ne.s32.totalorder %s404, %s406
      %p410 = scmp.eq.s32.totalorder %s29, 0
      %p411 = por %p409, %p410
      %p412 = scmp.ne.s32.totalorder %s404, %s406
      %p413 = scmp.eq.s32.totalorder %s34, 1
      %p414 = por %p412, %p413
      %p415 = scmp.ne.s32.totalorder %s406, %s407
      %p416 = scmp.eq.s32.totalorder %s34, 0
      %p417 = por %p415, %p416
      %p418 = scmp.ne.s32.totalorder %s406, %s407
      %p419 = scmp.eq.s32.totalorder %s35, 1
      %p420 = por %p418, %p419
      %p422 = scmp.ne.s32.totalorder %s407, %s421
      %p423 = scmp.eq.s32.totalorder %s35, 0
      %p424 = por %p422, %p423
      %s426 = sadd.s32 %s425, 1
      %p429 = scmp.eq.s32.totalorder %s29, 1
      %p430 = scmp.ne.s32.totalorder %s425, %s427
      %p431 = scmp.eq.s32.totalorder %s29, 0
      %p432 = por %p430, %p431
      %p433 = scmp.ne.s32.totalorder %s425, %s427
      %p434 = scmp.eq.s32.totalorder %s34, 1
      %p435 = por %p433, %p434
      %p436 = scmp.ne.s32.totalorder %s427, %s428
      %p437 = scmp.eq.s32.totalorder %s34, 0
      %p438 = por %p436, %p437
      %p439 = scmp.ne.s32.totalorder %s427, %s428
      %p440 = scmp.eq.s32.totalorder %s35, 1
      %p441 = por %p439, %p440
      %p443 = scmp.ne.s32.totalorder %s428, %s442
      %p444 = scmp.eq.s32.totalorder %s35, 0
      %p445 = por %p443, %p444
      %s447 = sadd.s32 %s446, 1
      %p450 = scmp.eq.s32.totalorder %s29, 1
      %p451 = scmp.ne.s32.totalorder %s446, %s448
      %p452 = scmp.eq.s32.totalorder %s29, 0
      %p453 = por %p451, %p452
      %p454 = scmp.ne.s32.totalorder %s446, %s448
      %p455 = scmp.eq.s32.totalorder %s34, 1
      %p456 = por %p454, %p455
      %p457 = scmp.ne.s32.totalorder %s448, %s449
      %p458 = scmp.eq.s32.totalorder %s34, 0
      %p459 = por %p457, %p458
      %p460 = scmp.ne.s32.totalorder %s448, %s449
      %p461 = scmp.eq.s32.totalorder %s35, 1
      %p462 = por %p460, %p461
      %p464 = scmp.ne.s32.totalorder %s449, %s463
      %p465 = scmp.eq.s32.totalorder %s35, 0
      %p466 = por %p464, %p465
      %s467 = ssub.s32 %s29, %s36
      %p468 = scmp.eq.s32.totalorder %s467, 0
      %s470 = sadd.s32 %s469, 1
      %s471 = scalar_select %p468, %s469, %s470
      %p474 = pneg %p468
      %p475 = scmp.eq.s32.totalorder %s29, 1
      %p476 = por %p474, %p475
      %p477 = scmp.ne.s32.totalorder %s469, %s472
      %p478 = scmp.eq.s32.totalorder %s29, 0
      %p479 = por %p477, %p478
      %p480 = scmp.ne.s32.totalorder %s469, %s472
      %p481 = scmp.eq.s32.totalorder %s34, 1
      %p482 = por %p480, %p481
      %p483 = scmp.ne.s32.totalorder %s472, %s473
      %p484 = scmp.eq.s32.totalorder %s34, 0
      %p485 = por %p483, %p484
      %p486 = scmp.ne.s32.totalorder %s472, %s473
      %p487 = scmp.eq.s32.totalorder %s35, 1
      %p488 = por %p486, %p487
      %p490 = scmp.ne.s32.totalorder %s473, %s489
      %p491 = scmp.eq.s32.totalorder %s35, 0
      %p492 = por %p490, %p491
      %p493 = scmp.le.s32.totalorder 1, %s29
      %p494 = scmp.lt.s32.totalorder %s29, 3
      %p495 = pnand %p493, %p494
      %p496 = pneg %p495
      // Predicated region
      $region9: #{big_model_forward.1} parent=5 // pred_check
        _
      $region10: #{big_model_forward.1} parent=5 // pred_check_branch
        %498 = sbr.rel (%p495) target = $region12
      $region11: #{big_model_forward.1} parent=5 // pred_region
        %s499 = ssub.s32 %s29, 1
        // Predicated region
        $region13: #{big_model_forward.1} parent=11 // pred_check
          %p500 = pneg %p102
        $region14: #{big_model_forward.1} parent=11 // pred_check_branch
          %502 = sbr.rel (%p500) target = $region16
        $region15: #{big_model_forward.1} parent=11 // pred_region
          _
        $region16: #{big_model_forward.1} parent=11 // pred_fallthru
          _
        // Predicated region
        $region17: #{big_model_forward.1} parent=11 // pred_check
          %p503 = pneg %p123
        $region18: #{big_model_forward.1} parent=11 // pred_check_branch
          %505 = sbr.rel (%p503) target = $region20
        $region19: #{big_model_forward.1} parent=11 // pred_region
          _
        $region20: #{big_model_forward.1} parent=11 // pred_fallthru
          _
        // Predicated region
        $region21: #{big_model_forward.1} parent=11 // pred_check
          %p506 = pneg %p144
        $region22: #{big_model_forward.1} parent=11 // pred_check_branch
          %508 = sbr.rel (%p506) target = $region24
        $region23: #{big_model_forward.1} parent=11 // pred_region
          _
        $region24: #{big_model_forward.1} parent=11 // pred_fallthru
          _
        // Predicated region
        $region25: #{big_model_forward.1} parent=11 // pred_check
          %p509 = pneg %p165
        $region26: #{big_model_forward.1} parent=11 // pred_check_branch
          %511 = sbr.rel (%p509) target = $region28
        $region27: #{big_model_forward.1} parent=11 // pred_region
          _
        $region28: #{big_model_forward.1} parent=11 // pred_fallthru
          _
        // Predicated region
        $region29: #{big_model_forward.1} parent=11 // pred_check
          %p512 = pneg %p186
        $region30: #{big_model_forward.1} parent=11 // pred_check_branch
          %514 = sbr.rel (%p512) target = $region32
        $region31: #{big_model_forward.1} parent=11 // pred_region
          _
        $region32: #{big_model_forward.1} parent=11 // pred_fallthru
          _
        // Predicated region
        $region33: #{big_model_forward.1} parent=11 // pred_check
          %p515 = pneg %p207
        $region34: #{big_model_forward.1} parent=11 // pred_check_branch
          %517 = sbr.rel (%p515) target = $region36
        $region35: #{big_model_forward.1} parent=11 // pred_region
          _
        $region36: #{big_model_forward.1} parent=11 // pred_fallthru
          _
        // Predicated region
        $region37: #{big_model_forward.1} parent=11 // pred_check
          %p518 = pneg %p228
        $region38: #{big_model_forward.1} parent=11 // pred_check_branch
          %520 = sbr.rel (%p518) target = $region40
        $region39: #{big_model_forward.1} parent=11 // pred_region
          _
        $region40: #{big_model_forward.1} parent=11 // pred_fallthru
          _
        // Predicated region
        $region41: #{big_model_forward.1} parent=11 // pred_check
          %p521 = pneg %p249
        $region42: #{big_model_forward.1} parent=11 // pred_check_branch
          %523 = sbr.rel (%p521) target = $region44
        $region43: #{big_model_forward.1} parent=11 // pred_region
          _
        $region44: #{big_model_forward.1} parent=11 // pred_fallthru
          _
        // Predicated region
        $region45: #{big_model_forward.1} parent=11 // pred_check
          %p524 = pneg %p270
        $region46: #{big_model_forward.1} parent=11 // pred_check_branch
          %526 = sbr.rel (%p524) target = $region48
        $region47: #{big_model_forward.1} parent=11 // pred_region
          _
        $region48: #{big_model_forward.1} parent=11 // pred_fallthru
          _
        // Predicated region
        $region49: #{big_model_forward.1} parent=11 // pred_check
          %p527 = pneg %p291
        $region50: #{big_model_forward.1} parent=11 // pred_check_branch
          %529 = sbr.rel (%p527) target = $region52
        $region51: #{big_model_forward.1} parent=11 // pred_region
          _
        $region52: #{big_model_forward.1} parent=11 // pred_fallthru
          _
        // Predicated region
        $region53: #{big_model_forward.1} parent=11 // pred_check
          %p530 = pneg %p312
        $region54: #{big_model_forward.1} parent=11 // pred_check_branch
          %532 = sbr.rel (%p530) target = $region56
        $region55: #{big_model_forward.1} parent=11 // pred_region
          _
        $region56: #{big_model_forward.1} parent=11 // pred_fallthru
          _
        // Predicated region
        $region57: #{big_model_forward.1} parent=11 // pred_check
          %p533 = pneg %p333
        $region58: #{big_model_forward.1} parent=11 // pred_check_branch
          %535 = sbr.rel (%p533) target = $region60
        $region59: #{big_model_forward.1} parent=11 // pred_region
          _
        $region60: #{big_model_forward.1} parent=11 // pred_fallthru
          _
        // Predicated region
        $region61: #{big_model_forward.1} parent=11 // pred_check
          %p536 = pneg %p354
        $region62: #{big_model_forward.1} parent=11 // pred_check_branch
          %538 = sbr.rel (%p536) target = $region64
        $region63: #{big_model_forward.1} parent=11 // pred_region
          _
        $region64: #{big_model_forward.1} parent=11 // pred_fallthru
          _
        // Predicated region
        $region65: #{big_model_forward.1} parent=11 // pred_check
          %p539 = pneg %p375
        $region66: #{big_model_forward.1} parent=11 // pred_check_branch
          %541 = sbr.rel (%p539) target = $region68
        $region67: #{big_model_forward.1} parent=11 // pred_region
          _
        $region68: #{big_model_forward.1} parent=11 // pred_fallthru
          _
        // Predicated region
        $region69: #{big_model_forward.1} parent=11 // pred_check
          %p542 = pneg %p396
        $region70: #{big_model_forward.1} parent=11 // pred_check_branch
          %544 = sbr.rel (%p542) target = $region72
        $region71: #{big_model_forward.1} parent=11 // pred_region
          _
        $region72: #{big_model_forward.1} parent=11 // pred_fallthru
          _
        // Predicated region
        $region73: #{big_model_forward.1} parent=11 // pred_check
          %p545 = pneg %p417
        $region74: #{big_model_forward.1} parent=11 // pred_check_branch
          %547 = sbr.rel (%p545) target = $region76
        $region75: #{big_model_forward.1} parent=11 // pred_region
          _
        $region76: #{big_model_forward.1} parent=11 // pred_fallthru
          _
        // Predicated region
        $region77: #{big_model_forward.1} parent=11 // pred_check
          %p548 = pneg %p438
        $region78: #{big_model_forward.1} parent=11 // pred_check_branch
          %550 = sbr.rel (%p548) target = $region80
        $region79: #{big_model_forward.1} parent=11 // pred_region
          _
        $region80: #{big_model_forward.1} parent=11 // pred_fallthru
          _
        // Predicated region
        $region81: #{big_model_forward.1} parent=11 // pred_check
          %p551 = pneg %p459
        $region82: #{big_model_forward.1} parent=11 // pred_check_branch
          %553 = sbr.rel (%p551) target = $region84
        $region83: #{big_model_forward.1} parent=11 // pred_region
          _
        $region84: #{big_model_forward.1} parent=11 // pred_fallthru
          _
      $region12: #{big_model_forward.1} parent=5 // pred_fallthru
        _
      %p554 = scmp.lt.s32.totalorder %s29, 2
      // Predicated region
      $region85: #{big_model_forward.1} parent=5 // pred_check
        %p555 = pneg %p554
      $region86: #{big_model_forward.1} parent=5 // pred_check_branch
        %557 = sbr.rel (%p555) target = $region88
      $region87: #{big_model_forward.1} parent=5 // pred_region
        // Predicated region
        $region89: #{big_model_forward.1} parent=87 // pred_check
          %p558 = pneg %p49
        $region90: #{big_model_forward.1} parent=87 // pred_check_branch
          %560 = sbr.rel (%p558) target = $region92
        $region91: #{big_model_forward.1} parent=87 // pred_region
          %s561 = smul.u32 2, %s29
          %p562 = scmp.lt.s32.totalorder %s561, 3
          %s563 = scalar_select %p562, %s561, 3
          %s564 = smul.addr %s563, 8
          %s565 = scalar_lea.vmem %s0, %s564
          %s566 = smul.u32 2, %s29
        $region92: #{big_model_forward.1} parent=87 // pred_fallthru
          _
        // Predicated region
        $region93: #{big_model_forward.1} parent=87 // pred_check
          %p567 = pneg %p75
        $region94: #{big_model_forward.1} parent=87 // pred_check_branch
          %569 = sbr.rel (%p567) target = $region96
        $region95: #{big_model_forward.1} parent=87 // pred_region
          %s570 = smul.u32 2, %s29
          %p571 = scmp.lt.s32.totalorder %s570, 3
          %s572 = scalar_select %p571, %s570, 3
          %s573 = scalar_lea.vmem %s1, %s572
          %s574 = smul.u32 2, %s29
        $region96: #{big_model_forward.1} parent=87 // pred_fallthru
          _
      $region88: #{big_model_forward.1} parent=5 // pred_fallthru
        _
      %p575 = scmp.le.s32.totalorder 1, %s29
      %p576 = scmp.lt.s32.totalorder %s29, 3
      %p577 = pnand %p575, %p576
      %p578 = pneg %p577
      // Predicated region
      $region97: #{big_model_forward.1} parent=5 // pred_check
        _
      $region98: #{big_model_forward.1} parent=5 // pred_check_branch
        %580 = sbr.rel (%p577) target = $region100
      $region99: #{big_model_forward.1} parent=5 // pred_region
        %s581 = ssub.s32 %s29, 1
        %s582 = smul.u32 2, %s34
        %p583 = scmp.lt.s32.totalorder %s582, 3
        %s584 = scalar_select %p583, %s582, 3
        %s585 = smul.addr %s584, 8
        %s586 = scalar_lea.vmem %s0, %s585
        %p587 = pneg %p55
        %p588 = pneg %p52
        %s589 = smul.u32 2, %s34
        %p590 = scmp.lt.s32.totalorder %s589, 3
        %s591 = scalar_select %p590, %s589, 3
        %s592 = scalar_lea.vmem %s1, %s591
        %p593 = pneg %p81
        %p594 = pneg %p78
        %p595 = pneg %p102
        %p596 = pneg %p99
        %p597 = pneg %p123
        %p598 = pneg %p120
        %p599 = pneg %p144
        %p600 = pneg %p141
        %p601 = pneg %p165
        %p602 = pneg %p162
        %p603 = pneg %p186
        %p604 = pneg %p183
        %p605 = pneg %p207
        %p606 = pneg %p204
        %p607 = pneg %p228
        %p608 = pneg %p225
        %p609 = pneg %p249
        %p610 = pneg %p246
        %p611 = pneg %p270
        %p612 = pneg %p267
        %p613 = pneg %p291
        %p614 = pneg %p288
        %p615 = pneg %p312
        %p616 = pneg %p309
        %p617 = pneg %p333
        %p618 = pneg %p330
        %p619 = pneg %p354
        %p620 = pneg %p351
        %p621 = pneg %p375
        %p622 = pneg %p372
        %p623 = pneg %p396
        %p624 = pneg %p393
        %p625 = pneg %p417
        %p626 = pneg %p414
        %p627 = pneg %p438
        %p628 = pneg %p435
        %p629 = pneg %p459
        %p630 = pneg %p456
        %p631 = pneg %p485
        %p632 = pneg %p482
        %s633 = sand.u32 %s472, 1
        %s634 = scalar_lea.sflag [#allocation4], %s633
        %s635 = sand.u32 %s472, 1
        %s636 = smul.addr %s635, 2
        %s637 = scalar_lea.vmem [#allocation3], %s636
        %s638 = smul.u32 2, %s34
        %p639 = scmp.lt.s32.totalorder %s638, 3
        %s640 = scalar_select %p639, %s638, 3
        %s641 = smul.addr %s640, 8
        %s642 = scalar_lea.vmem %s0, %s641
        %s643 = smul.u32 2, %s34
        %s644 = smul.u32 2, %s34
        %p645 = scmp.lt.s32.totalorder %s644, 3
        %s646 = scalar_select %p645, %s644, 3
        %s647 = scalar_lea.vmem %s1, %s646
        %s648 = smul.u32 2, %s34
        %s649 = smul.u32 2, %s34
        %v650 = vld [vmem:[%s642] sm:$0xff]
        %v651 = vld [vmem:[%s642 + $0x8] sm:$0xff]
        %v652 = vld [vmem:[%s647] sm:$0x1]
        %v653 = vld [vmem:[%s647 + $0x1] sm:$0x1]
        %v656 = vperm.slane %v652, 0
        %v657 = vperm.slane %v653, 0
        %v660 = vld [vmem:[%s2] sm:$0x1]
        %v661 = vld [vmem:[%s3] sm:$0x1]
        %vm662 = vcmask 261120
        %v663 = vsel %vm662, %v650, 0.0
        %664 = vadd.xlane.f32.xlu0 %v663
        %v665 = vpop.xlane.xlu0 %664
        %v666 = vsel %vm662, %v651, 0.0
        %667 = vadd.xlane.f32.xlu0 %v666
        %v668 = vpop.xlane.xlu0 %667
        %v669 = vrcp.pop 32.0
        %v670 = vmul.f32 32.0, %v669
        %v671 = vsub.f32 1.0, %v670
        %v672 = vmul.f32 %v669, %v671
        %v673 = vadd.f32 %v669, %v672
        %vm674 = vweird.f32 %v669
        %v675 = vsel %vm674, %v669, %v673
        %v676 = vmul.f32 %v665, %v675
        %v677 = vmul.f32 %v668, %v675
        %v678 = vsub.f32 %v650, %v676
        %v679 = vsub.f32 %v651, %v677
        %v680 = vmul.f32 %v678, %v678
        %v681 = vmul.f32 %v679, %v679
        %v682 = vsel %vm662, %v680, 0.0
        %683 = vadd.xlane.f32.xlu0 %v682
        %v684 = vpop.xlane.xlu0 %683
        %v685 = vsel %vm662, %v681, 0.0
        %686 = vadd.xlane.f32.xlu0 %v685
        %v687 = vpop.xlane.xlu0 %686
        %v688 = vmul.f32 %v684, %v675
        %v689 = vmul.f32 %v687, %v675
        %v690 = vadd.f32 %v688, 1e-12
        %v691 = vadd.f32 %v689, 1e-12
        %v692 = vrsqrt.pop %v690
        %v693 = vmul.f32 %v692, %v690
        %v694 = vmul.f32 %v693, %v692
        %v695 = vmul.f32 0.5, %v694
        %v696 = vsub.f32 1.5, %v695
        %v697 = vmul.f32 %v692, %v696
        %vm698 = vweird.f32 %v690
        %vm699 = vweird.f32 %v692
        %vm700 = vmor %vm698, %vm699
        %v701 = vsel %vm700, %v692, %v697
        %v702 = vrsqrt.pop %v691
        %v703 = vmul.f32 %v702, %v691
        %v704 = vmul.f32 %v703, %v702
        %v705 = vmul.f32 0.5, %v704
        %v706 = vsub.f32 1.5, %v705
        %v707 = vmul.f32 %v702, %v706
        %vm708 = vweird.f32 %v691
        %vm709 = vweird.f32 %v702
        %vm710 = vmor %vm708, %vm709
        %v711 = vsel %vm710, %v702, %v707
        %v712 = vmul.f32 %v678, %v701
        %v713 = vmul.f32 %v679, %v711
        %v715 = vperm.slane %v660, 0
        %v717 = vmul.f32 %v712, %v715
        %v718 = vmul.f32 %v713, %v715
        %v720 = vperm.slane %v661, 0
        %v722 = vadd.f32 %v717, %v720
        %v723 = vadd.f32 %v718, %v720
        %v724 = vld [vmem:[%s4] sm:$0xff]
        %v725 = vld [vmem:[%s4 + $0x8] sm:$0xff]
        %v726 = vld [vmem:[%s4 + $0x10] sm:$0xff]
        %v727 = vld [vmem:[%s4 + $0x18] sm:$0xff]
        %v728 = vld [vmem:[%s5] sm:$0x1]
        %v730 = vperm.slane %v728, 0
        %v733 = vsel %vm662, %v722, 0
        %v736 = vsel %vm662, %v723, 0
        %738 = vmatpush.msra.mxu0 0.0
        %739 = vmatpush.msra.mxu0 0.0
        %740 = vmatpush.msra.mxu0 0.0
        %741 = vmatpush.msra.mxu0 0.0
        %742 = vmatpush.msra.mxu0 0.0
        %743 = vmatpush.msra.mxu0 0.0
        %744 = vmatpush.msra.mxu0 0.0
        %745 = vmatpush.msra.mxu0 0.0
        %746 = vmatpush.msra.mxu0 0.0
        %747 = vmatpush.msra.mxu0 0.0
        %748 = vmatpush.msra.mxu0 0.0
        %749 = vmatpush.msra.mxu0 0.0
        %750 = vmatpush.msra.mxu0 %v727
        %751 = vmatpush.msra.mxu0 %v726
        %752 = vmatpush.msra.mxu0 %v725
        %753 = vmatpush.msra.mxu0 %v724
        %754 = vmatmul.f32.gmra.mxu0 %v733
        %v755 = vpop.f32.mrf.mxu0
        %v756 = vadd.f32 %v730, %v755
        %757 = vmatmul.f32.gmra.mxu0 %v736
        %v758 = vpop.f32.mrf.mxu0
        %v759 = vadd.f32 %v730, %v758
        %760 = vdwg.mxu0
        %762 = vrot.lane.b32.xlu0 %v756, 96
        %v763 = vpop.permute.xlu0 %762
        %vm764 = vcmask 130048
        %v765 = vsel %vm764, %v756, 0
        %v767 = vsel %vm764, %v763, 0
        %769 = vmatpush.xpose.msra.mxu0 0.0
        %770 = vmatpush.xpose.msra.mxu0 0.0
        %771 = vmatpush.xpose.msra.mxu0 0.0
        %772 = vmatpush.xpose.msra.mxu0 0.0
        %773 = vmatpush.xpose.msra.mxu0 0.0
        %774 = vmatpush.xpose.msra.mxu0 0.0
        %775 = vmatpush.xpose.msra.mxu0 0.0
        %776 = vmatpush.xpose.msra.mxu0 0.0
        %777 = vmatpush.xpose.msra.mxu0 0.0
        %778 = vmatpush.xpose.msra.mxu0 0.0
        %779 = vmatpush.xpose.msra.mxu0 0.0
        %780 = vmatpush.xpose.msra.mxu0 0.0
        %781 = vmatpush.xpose.msra.mxu0 0.0
        %782 = vmatpush.xpose.msra.mxu0 0.0
        %783 = vmatpush.xpose.msra.mxu0 0.0
        %784 = vmatpush.xpose.msra.mxu0 %v767
        %785 = vmatmul.f32.gmra.mxu0 %v765
        %v786 = vpop.f32.mrf.mxu0
        %v787 = vadd.f32 %v656, %v786
        %788 = vdwg.mxu0
        %790 = vrot.lane.b32.xlu0 %v759, 96
        %v791 = vpop.permute.xlu0 %790
        %v792 = vsel %vm764, %v759, 0
        %v794 = vsel %vm764, %v791, 0
        %796 = vmatpush.xpose.msra.mxu0 0.0
        %797 = vmatpush.xpose.msra.mxu0 0.0
        %798 = vmatpush.xpose.msra.mxu0 0.0
        %799 = vmatpush.xpose.msra.mxu0 0.0
        %800 = vmatpush.xpose.msra.mxu0 0.0
        %801 = vmatpush.xpose.msra.mxu0 0.0
        %802 = vmatpush.xpose.msra.mxu0 0.0
        %803 = vmatpush.xpose.msra.mxu0 0.0
        %804 = vmatpush.xpose.msra.mxu0 0.0
        %805 = vmatpush.xpose.msra.mxu0 0.0
        %806 = vmatpush.xpose.msra.mxu0 0.0
        %807 = vmatpush.xpose.msra.mxu0 0.0
        %808 = vmatpush.xpose.msra.mxu0 0.0
        %809 = vmatpush.xpose.msra.mxu0 0.0
        %810 = vmatpush.xpose.msra.mxu0 0.0
        %811 = vmatpush.xpose.msra.mxu0 %v794
        %812 = vmatmul.f32.gmra.mxu0 %v792
        %v813 = vpop.f32.mrf.mxu0
        %v814 = vadd.f32 %v657, %v813
        %815 = vdwg.mxu0
        %vm816 = vcmask 64512
        %v817 = vsel %vm816, %v787, -inf
        %818 = vmax.xlane.f32.xlu0 %v817
        %v819 = vpop.xlane.xlu0 %818
        %v820 = vsel %vm816, %v814, -inf
        %821 = vmax.xlane.f32.xlu0 %v820
        %v822 = vpop.xlane.xlu0 %821
        %v823 = vsub.f32 %v787, %v819
        %v824 = vsub.f32 %v814, %v822
        %v825 = vmul.f32 %v823, 1.442695
        %v826 = vpow.pop %v825
        %v827 = vmul.f32 %v824, 1.442695
        %v828 = vpow.pop %v827
        %v829 = vsel %vm816, %v826, 0.0
        %830 = vadd.xlane.f32.xlu0 %v829
        %v831 = vpop.xlane.xlu0 %830
        %v832 = vsel %vm816, %v828, 0.0
        %833 = vadd.xlane.f32.xlu0 %v832
        %v834 = vpop.xlane.xlu0 %833
        %v835 = vrcp.pop %v831
        %v836 = vrcp.pop %v834
        %v837 = vmul.f32 %v826, %v835
        %v838 = vmul.f32 %v828, %v836
        %839 = vrot.lane.b32.xlu0 %v756, 64
        %v840 = vpop.permute.xlu0 %839
        %v843 = vsel %vm816, %v837, 0
        %845 = vmatpush.msra.mxu0 0.0
        %846 = vmatpush.msra.mxu0 0.0
        %847 = vmatpush.msra.mxu0 0.0
        %848 = vmatpush.msra.mxu0 0.0
        %849 = vmatpush.msra.mxu0 0.0
        %850 = vmatpush.msra.mxu0 0.0
        %851 = vmatpush.msra.mxu0 0.0
        %852 = vmatpush.msra.mxu0 0.0
        %853 = vmatpush.msra.mxu0 0.0
        %854 = vmatpush.msra.mxu0 0.0
        %855 = vmatpush.msra.mxu0 0.0
        %856 = vmatpush.msra.mxu0 0.0
        %857 = vmatpush.msra.mxu0 0.0
        %858 = vmatpush.msra.mxu0 0.0
        %859 = vmatpush.msra.mxu0 0.0
        %860 = vmatpush.msra.mxu0 %v840
        %861 = vmatmul.f32.gmra.mxu0 %v843
        %v862 = vpop.f32.mrf.mxu0
        %v863 = vadd.f32 0.0, %v862
        %864 = vdwg.mxu0
        %865 = vrot.lane.b32.xlu0 %v759, 64
        %v866 = vpop.permute.xlu0 %865
        %v869 = vsel %vm816, %v838, 0
        %871 = vmatpush.msra.mxu0 0.0
        %872 = vmatpush.msra.mxu0 0.0
        %873 = vmatpush.msra.mxu0 0.0
        %874 = vmatpush.msra.mxu0 0.0
        %875 = vmatpush.msra.mxu0 0.0
        %876 = vmatpush.msra.mxu0 0.0
        %877 = vmatpush.msra.mxu0 0.0
        %878 = vmatpush.msra.mxu0 0.0
        %879 = vmatpush.msra.mxu0 0.0
        %880 = vmatpush.msra.mxu0 0.0
        %881 = vmatpush.msra.mxu0 0.0
        %882 = vmatpush.msra.mxu0 0.0
        %883 = vmatpush.msra.mxu0 0.0
        %884 = vmatpush.msra.mxu0 0.0
        %885 = vmatpush.msra.mxu0 0.0
        %886 = vmatpush.msra.mxu0 %v866
        %887 = vmatmul.f32.gmra.mxu0 %v869
        %v888 = vpop.f32.mrf.mxu0
        %v889 = vadd.f32 0.0, %v888
        %890 = vdwg.mxu0
        %891 = vst.msk [vmem:[#allocation2] sm:$0xff] %vm764, %v863
        %892 = vst.msk [vmem:[#allocation2 + $0x8] sm:$0xff] %vm764, %v889
        %893 = vrot.lane.b32.xlu0 %v756, 112
        %v894 = vpop.permute.xlu0 %893
        %895 = vrot.lane.b32.xlu0 %v756, 80
        %v896 = vpop.permute.xlu0 %895
        %v897 = vsel %vm764, %v894, 0
        %v899 = vsel %vm764, %v896, 0
        %901 = vmatpush.xpose.msra.mxu0 0.0
        %902 = vmatpush.xpose.msra.mxu0 0.0
        %903 = vmatpush.xpose.msra.mxu0 0.0
        %904 = vmatpush.xpose.msra.mxu0 0.0
        %905 = vmatpush.xpose.msra.mxu0 0.0
        %906 = vmatpush.xpose.msra.mxu0 0.0
        %907 = vmatpush.xpose.msra.mxu0 0.0
        %908 = vmatpush.xpose.msra.mxu0 0.0
        %909 = vmatpush.xpose.msra.mxu0 0.0
        %910 = vmatpush.xpose.msra.mxu0 0.0
        %911 = vmatpush.xpose.msra.mxu0 0.0
        %912 = vmatpush.xpose.msra.mxu0 0.0
        %913 = vmatpush.xpose.msra.mxu0 0.0
        %914 = vmatpush.xpose.msra.mxu0 0.0
        %915 = vmatpush.xpose.msra.mxu0 0.0
        %916 = vmatpush.xpose.msra.mxu0 %v899
        %917 = vmatmul.f32.gmra.mxu0 %v897
        %v918 = vpop.f32.mrf.mxu0
        %v919 = vadd.f32 %v656, %v918
        %920 = vdwg.mxu0
        %921 = vrot.lane.b32.xlu0 %v759, 112
        %v922 = vpop.permute.xlu0 %921
        %923 = vrot.lane.b32.xlu0 %v759, 80
        %v924 = vpop.permute.xlu0 %923
        %v925 = vsel %vm764, %v922, 0
        %v927 = vsel %vm764, %v924, 0
        %929 = vmatpush.xpose.msra.mxu0 0.0
        %930 = vmatpush.xpose.msra.mxu0 0.0
        %931 = vmatpush.xpose.msra.mxu0 0.0
        %932 = vmatpush.xpose.msra.mxu0 0.0
        %933 = vmatpush.xpose.msra.mxu0 0.0
        %934 = vmatpush.xpose.msra.mxu0 0.0
        %935 = vmatpush.xpose.msra.mxu0 0.0
        %936 = vmatpush.xpose.msra.mxu0 0.0
        %937 = vmatpush.xpose.msra.mxu0 0.0
        %938 = vmatpush.xpose.msra.mxu0 0.0
        %939 = vmatpush.xpose.msra.mxu0 0.0
        %940 = vmatpush.xpose.msra.mxu0 0.0
        %941 = vmatpush.xpose.msra.mxu0 0.0
        %942 = vmatpush.xpose.msra.mxu0 0.0
        %943 = vmatpush.xpose.msra.mxu0 0.0
        %944 = vmatpush.xpose.msra.mxu0 %v927
        %945 = vmatmul.f32.gmra.mxu0 %v925
        %v946 = vpop.f32.mrf.mxu0
        %v947 = vadd.f32 %v657, %v946
        %948 = vdwg.mxu0
        %v949 = vsel %vm816, %v919, -inf
        %950 = vmax.xlane.f32.xlu0 %v949
        %v951 = vpop.xlane.xlu0 %950
        %v952 = vsel %vm816, %v947, -inf
        %953 = vmax.xlane.f32.xlu0 %v952
        %v954 = vpop.xlane.xlu0 %953
        %v955 = vsub.f32 %v919, %v951
        %v956 = vsub.f32 %v947, %v954
        %v957 = vmul.f32 %v955, 1.442695
        %v958 = vpow.pop %v957
        %v959 = vmul.f32 %v956, 1.442695
        %v960 = vpow.pop %v959
        %v961 = vsel %vm816, %v958, 0.0
        %962 = vadd.xlane.f32.xlu0 %v961
        %v963 = vpop.xlane.xlu0 %962
        %v964 = vsel %vm816, %v960, 0.0
        %965 = vadd.xlane.f32.xlu0 %v964
        %v966 = vpop.xlane.xlu0 %965
        %v967 = vrcp.pop %v963
        %v968 = vrcp.pop %v966
        %v969 = vmul.f32 %v958, %v967
        %v970 = vmul.f32 %v960, %v968
        %971 = vrot.lane.b32.xlu0 %v756, 48
        %v972 = vpop.permute.xlu0 %971
        %v975 = vsel %vm816, %v969, 0
        %977 = vmatpush.msra.mxu0 0.0
        %978 = vmatpush.msra.mxu0 0.0
        %979 = vmatpush.msra.mxu0 0.0
        %980 = vmatpush.msra.mxu0 0.0
        %981 = vmatpush.msra.mxu0 0.0
        %982 = vmatpush.msra.mxu0 0.0
        %983 = vmatpush.msra.mxu0 0.0
        %984 = vmatpush.msra.mxu0 0.0
        %985 = vmatpush.msra.mxu0 0.0
        %986 = vmatpush.msra.mxu0 0.0
        %987 = vmatpush.msra.mxu0 0.0
        %988 = vmatpush.msra.mxu0 0.0
        %989 = vmatpush.msra.mxu0 0.0
        %990 = vmatpush.msra.mxu0 0.0
        %991 = vmatpush.msra.mxu0 0.0
        %992 = vmatpush.msra.mxu0 %v972
        %993 = vmatmul.f32.gmra.mxu0 %v975
        %v994 = vpop.f32.mrf.mxu0
        %v995 = vadd.f32 0.0, %v994
        %996 = vdwg.mxu0
        %997 = vrot.lane.b32.xlu0 %v759, 48
        %v998 = vpop.permute.xlu0 %997
        %v1001 = vsel %vm816, %v970, 0
        %1003 = vmatpush.msra.mxu0 0.0
        %1004 = vmatpush.msra.mxu0 0.0
        %1005 = vmatpush.msra.mxu0 0.0
        %1006 = vmatpush.msra.mxu0 0.0
        %1007 = vmatpush.msra.mxu0 0.0
        %1008 = vmatpush.msra.mxu0 0.0
        %1009 = vmatpush.msra.mxu0 0.0
        %1010 = vmatpush.msra.mxu0 0.0
        %1011 = vmatpush.msra.mxu0 0.0
        %1012 = vmatpush.msra.mxu0 0.0
        %1013 = vmatpush.msra.mxu0 0.0
        %1014 = vmatpush.msra.mxu0 0.0
        %1015 = vmatpush.msra.mxu0 0.0
        %1016 = vmatpush.msra.mxu0 0.0
        %1017 = vmatpush.msra.mxu0 0.0
        %1018 = vmatpush.msra.mxu0 %v998
        %1019 = vmatmul.f32.gmra.mxu0 %v1001
        %v1020 = vpop.f32.mrf.mxu0
        %v1021 = vadd.f32 0.0, %v1020
        %1022 = vdwg.mxu0
        %1025 = vrot.lane.b32.xlu0 %v995, 16
        %v1026 = vpop.permute.xlu0 %1025
        %1027 = vrot.lane.b32.xlu0 %v1021, 16
        %v1028 = vpop.permute.xlu0 %1027
        %vm1031 = vcmask 261248
        %1032 = vst.msk [vmem:[#allocation2] sm:$0xff] %vm1031, %v1026
        %1033 = vst.msk [vmem:[#allocation2 + $0x8] sm:$0xff] %vm1031, %v1028
        %v1034 = vld [vmem:[#allocation2] sm:$0xff]
        %v1035 = vld [vmem:[#allocation2 + $0x8] sm:$0xff]
        %v1036 = vld [vmem:[%s6] sm:$0xff]
        %v1037 = vld [vmem:[%s6 + $0x8] sm:$0xff]
        %v1038 = vld [vmem:[%s6 + $0x10] sm:$0xff]
        %v1039 = vld [vmem:[%s6 + $0x18] sm:$0xff]
        %v1040 = vld [vmem:[%s7] sm:$0x1]
        %v1042 = vperm.slane %v1040, 0
        %v1045 = vsel %vm662, %v1034, 0
        %v1048 = vsel %vm662, %v1035, 0
        %1050 = vmatpush.msra.mxu0 0.0
        %1051 = vmatpush.msra.mxu0 0.0
        %1052 = vmatpush.msra.mxu0 0.0
        %1053 = vmatpush.msra.mxu0 0.0
        %1054 = vmatpush.msra.mxu0 0.0
        %1055 = vmatpush.msra.mxu0 0.0
        %1056 = vmatpush.msra.mxu0 0.0
        %1057 = vmatpush.msra.mxu0 0.0
        %1058 = vmatpush.msra.mxu0 0.0
        %1059 = vmatpush.msra.mxu0 0.0
        %1060 = vmatpush.msra.mxu0 0.0
        %1061 = vmatpush.msra.mxu0 0.0
        %1062 = vmatpush.msra.mxu0 %v1039
        %1063 = vmatpush.msra.mxu0 %v1038
        %1064 = vmatpush.msra.mxu0 %v1037
        %1065 = vmatpush.msra.mxu0 %v1036
        %1066 = vmatmul.f32.gmra.mxu0 %v1045
        %v1067 = vpop.f32.mrf.mxu0
        %v1068 = vadd.f32 %v1042, %v1067
        %1069 = vmatmul.f32.gmra.mxu0 %v1048
        %v1070 = vpop.f32.mrf.mxu0
        %v1071 = vadd.f32 %v1042, %v1070
        %1072 = vdwg.mxu0
        %v1073 = vadd.f32 %v722, %v1068
        %v1074 = vadd.f32 %v723, %v1071
        %v1075 = vld [vmem:[%s8] sm:$0x1]
        %v1076 = vld [vmem:[%s9] sm:$0x1]
        %v1077 = vsel %vm662, %v1073, 0.0
        %1078 = vadd.xlane.f32.xlu0 %v1077
        %v1079 = vpop.xlane.xlu0 %1078
        %v1080 = vsel %vm662, %v1074, 0.0
        %1081 = vadd.xlane.f32.xlu0 %v1080
        %v1082 = vpop.xlane.xlu0 %1081
        %v1083 = vmul.f32 %v1079, %v675
        %v1084 = vmul.f32 %v1082, %v675
        %v1085 = vsub.f32 %v1073, %v1083
        %v1086 = vsub.f32 %v1074, %v1084
        %v1087 = vmul.f32 %v1085, %v1085
        %v1088 = vmul.f32 %v1086, %v1086
        %v1089 = vsel %vm662, %v1087, 0.0
        %1090 = vadd.xlane.f32.xlu0 %v1089
        %v1091 = vpop.xlane.xlu0 %1090
        %v1092 = vsel %vm662, %v1088, 0.0
        %1093 = vadd.xlane.f32.xlu0 %v1092
        %v1094 = vpop.xlane.xlu0 %1093
        %v1095 = vmul.f32 %v1091, %v675
        %v1096 = vmul.f32 %v1094, %v675
        %v1097 = vadd.f32 %v1095, 1e-12
        %v1098 = vadd.f32 %v1096, 1e-12
        %v1099 = vrsqrt.pop %v1097
        %v1100 = vmul.f32 %v1099, %v1097
        %v1101 = vmul.f32 %v1100, %v1099
        %v1102 = vmul.f32 0.5, %v1101
        %v1103 = vsub.f32 1.5, %v1102
        %v1104 = vmul.f32 %v1099, %v1103
        %vm1105 = vweird.f32 %v1097
        %vm1106 = vweird.f32 %v1099
        %vm1107 = vmor %vm1105, %vm1106
        %v1108 = vsel %vm1107, %v1099, %v1104
        %v1109 = vrsqrt.pop %v1098
        %v1110 = vmul.f32 %v1109, %v1098
        %v1111 = vmul.f32 %v1110, %v1109
        %v1112 = vmul.f32 0.5, %v1111
        %v1113 = vsub.f32 1.5, %v1112
        %v1114 = vmul.f32 %v1109, %v1113
        %vm1115 = vweird.f32 %v1098
        %vm1116 = vweird.f32 %v1109
        %vm1117 = vmor %vm1115, %vm1116
        %v1118 = vsel %vm1117, %v1109, %v1114
        %v1119 = vmul.f32 %v1085, %v1108
        %v1120 = vmul.f32 %v1086, %v1118
        %v1122 = vperm.slane %v1075, 0
        %v1124 = vmul.f32 %v1119, %v1122
        %v1125 = vmul.f32 %v1120, %v1122
        %v1127 = vperm.slane %v1076, 0
        %v1129 = vadd.f32 %v1124, %v1127
        %v1130 = vadd.f32 %v1125, %v1127
        %v1131 = vld [vmem:[%s10] sm:$0xff]
        %v1132 = vld [vmem:[%s10 + $0x8] sm:$0xff]
        %v1133 = vld [vmem:[%s10 + $0x10] sm:$0xff]
        %v1134 = vld [vmem:[%s10 + $0x18] sm:$0xff]
        %v1135 = vld [vmem:[%s11] sm:$0x1]
        %v1137 = vperm.slane %v1135, 0
        %v1140 = vsel %vm662, %v1129, 0
        %v1143 = vsel %vm662, %v1130, 0
        %1145 = vmatpush.msra.mxu0 0.0
        %1146 = vmatpush.msra.mxu0 0.0
        %1147 = vmatpush.msra.mxu0 0.0
        %1148 = vmatpush.msra.mxu0 0.0
        %1149 = vmatpush.msra.mxu0 0.0
        %1150 = vmatpush.msra.mxu0 0.0
        %1151 = vmatpush.msra.mxu0 0.0
        %1152 = vmatpush.msra.mxu0 0.0
        %1153 = vmatpush.msra.mxu0 0.0
        %1154 = vmatpush.msra.mxu0 0.0
        %1155 = vmatpush.msra.mxu0 0.0
        %1156 = vmatpush.msra.mxu0 0.0
        %1157 = vmatpush.msra.mxu0 %v1134
        %1158 = vmatpush.msra.mxu0 %v1133
        %1159 = vmatpush.msra.mxu0 %v1132
        %1160 = vmatpush.msra.mxu0 %v1131
        %1161 = vmatmul.f32.gmra.mxu0 %v1140
        %v1162 = vpop.f32.mrf.mxu0
        %v1163 = vadd.f32 %v1137, %v1162
        %1164 = vmatmul.f32.gmra.mxu0 %v1143
        %v1165 = vpop.f32.mrf.mxu0
        %v1166 = vadd.f32 %v1137, %v1165
        %1167 = vdwg.mxu0
        %v1168 = vmul.f32 %v1163, %v1163
        %v1169 = vmul.f32 %v1166, %v1166
        %v1170 = vmul.f32 %v1163, %v1168
        %v1171 = vmul.f32 %v1166, %v1169
        %v1172 = vmul.f32 %v1170, 0.044715
        %v1173 = vmul.f32 %v1171, 0.044715
        %v1174 = vadd.f32 %v1163, %v1172
        %v1175 = vadd.f32 %v1166, %v1173
        %v1176 = vmul.f32 %v1174, 0.7978846
        %v1177 = vmul.f32 %v1175, 0.7978846
        %v1178 = vtanh.pop %v1176
        %v1179 = vtanh.pop %v1177
        %v1180 = vadd.f32 %v1178, 1.0
        %v1181 = vadd.f32 %v1179, 1.0
        %v1182 = vmul.f32 %v1180, 0.5
        %v1183 = vmul.f32 %v1181, 0.5
        %v1184 = vmul.f32 %v1163, %v1182
        %v1185 = vmul.f32 %v1166, %v1183
        %v1186 = vld [vmem:[%s12] sm:$0xff]
        %v1187 = vld [vmem:[%s12 + $0x8] sm:$0xff]
        %v1188 = vld [vmem:[%s12 + $0x10] sm:$0xff]
        %v1189 = vld [vmem:[%s12 + $0x18] sm:$0xff]
        %v1190 = vld [vmem:[%s12 + $0x20] sm:$0xff]
        %v1191 = vld [vmem:[%s12 + $0x28] sm:$0xff]
        %v1192 = vld [vmem:[%s12 + $0x30] sm:$0xff]
        %v1193 = vld [vmem:[%s12 + $0x38] sm:$0xff]
        %v1194 = vld [vmem:[%s13] sm:$0x1]
        %v1196 = vperm.slane %v1194, 0
        %vm1198 = vcmask 523264
        %v1200 = vsel %vm1198, %v1184, 0
        %v1203 = vsel %vm1198, %v1185, 0
        %1205 = vmatpush.msra.mxu0 0.0
        %1206 = vmatpush.msra.mxu0 0.0
        %1207 = vmatpush.msra.mxu0 0.0
        %1208 = vmatpush.msra.mxu0 0.0
        %1209 = vmatpush.msra.mxu0 0.0
        %1210 = vmatpush.msra.mxu0 0.0
        %1211 = vmatpush.msra.mxu0 0.0
        %1212 = vmatpush.msra.mxu0 0.0
        %1213 = vmatpush.msra.mxu0 %v1193
        %1214 = vmatpush.msra.mxu0 %v1192
        %1215 = vmatpush.msra.mxu0 %v1191
        %1216 = vmatpush.msra.mxu0 %v1190
        %1217 = vmatpush.msra.mxu0 %v1189
        %1218 = vmatpush.msra.mxu0 %v1188
        %1219 = vmatpush.msra.mxu0 %v1187
        %1220 = vmatpush.msra.mxu0 %v1186
        %1221 = vmatmul.f32.gmra.mxu0 %v1200
        %v1222 = vpop.f32.mrf.mxu0
        %v1223 = vadd.f32 %v1196, %v1222
        %1224 = vmatmul.f32.gmra.mxu0 %v1203
        %v1225 = vpop.f32.mrf.mxu0
        %v1226 = vadd.f32 %v1196, %v1225
        %1227 = vdwg.mxu0
        %v1228 = vadd.f32 %v1129, %v1223
        %v1229 = vadd.f32 %v1130, %v1226
        %v1230 = vld [vmem:[%s14] sm:$0x1]
        %v1231 = vld [vmem:[%s15] sm:$0x1]
        %v1232 = vsel %vm662, %v1228, 0.0
        %1233 = vadd.xlane.f32.xlu0 %v1232
        %v1234 = vpop.xlane.xlu0 %1233
        %v1235 = vsel %vm662, %v1229, 0.0
        %1236 = vadd.xlane.f32.xlu0 %v1235
        %v1237 = vpop.xlane.xlu0 %1236
        %v1238 = vmul.f32 %v1234, %v675
        %v1239 = vmul.f32 %v1237, %v675
        %v1240 = vsub.f32 %v1228, %v1238
        %v1241 = vsub.f32 %v1229, %v1239
        %v1242 = vmul.f32 %v1240, %v1240
        %v1243 = vmul.f32 %v1241, %v1241
        %v1244 = vsel %vm662, %v1242, 0.0
        %1245 = vadd.xlane.f32.xlu0 %v1244
        %v1246 = vpop.xlane.xlu0 %1245
        %v1247 = vsel %vm662, %v1243, 0.0
        %1248 = vadd.xlane.f32.xlu0 %v1247
        %v1249 = vpop.xlane.xlu0 %1248
        %v1250 = vmul.f32 %v1246, %v675
        %v1251 = vmul.f32 %v1249, %v675
        %v1252 = vadd.f32 %v1250, 1e-12
        %v1253 = vadd.f32 %v1251, 1e-12
        %v1254 = vrsqrt.pop %v1252
        %v1255 = vmul.f32 %v1254, %v1252
        %v1256 = vmul.f32 %v1255, %v1254
        %v1257 = vmul.f32 0.5, %v1256
        %v1258 = vsub.f32 1.5, %v1257
        %v1259 = vmul.f32 %v1254, %v1258
        %vm1260 = vweird.f32 %v1252
        %vm1261 = vweird.f32 %v1254
        %vm1262 = vmor %vm1260, %vm1261
        %v1263 = vsel %vm1262, %v1254, %v1259
        %v1264 = vrsqrt.pop %v1253
        %v1265 = vmul.f32 %v1264, %v1253
        %v1266 = vmul.f32 %v1265, %v1264
        %v1267 = vmul.f32 0.5, %v1266
        %v1268 = vsub.f32 1.5, %v1267
        %v1269 = vmul.f32 %v1264, %v1268
        %vm1270 = vweird.f32 %v1253
        %vm1271 = vweird.f32 %v1264
        %vm1272 = vmor %vm1270, %vm1271
        %v1273 = vsel %vm1272, %v1264, %v1269
        %v1274 = vmul.f32 %v1240, %v1263
        %v1275 = vmul.f32 %v1241, %v1273
        %v1277 = vperm.slane %v1230, 0
        %v1279 = vmul.f32 %v1274, %v1277
        %v1280 = vmul.f32 %v1275, %v1277
        %v1282 = vperm.slane %v1231, 0
        %v1284 = vadd.f32 %v1279, %v1282
        %v1285 = vadd.f32 %v1280, %v1282
        %s1286 = scalar_lea.vmem %s4, 32
        %v1287 = vld [vmem:[%s1286] sm:$0xff]
        %v1288 = vld [vmem:[%s1286 + $0x8] sm:$0xff]
        %v1289 = vld [vmem:[%s1286 + $0x10] sm:$0xff]
        %v1290 = vld [vmem:[%s1286 + $0x18] sm:$0xff]
        %s1291 = scalar_lea.vmem %s5, 1
        %v1292 = vld [vmem:[%s1291] sm:$0x1]
        %v1294 = vperm.slane %v1292, 0
        %v1297 = vsel %vm662, %v1284, 0
        %v1300 = vsel %vm662, %v1285, 0
        %1302 = vmatpush.msra.mxu0 0.0
        %1303 = vmatpush.msra.mxu0 0.0
        %1304 = vmatpush.msra.mxu0 0.0
        %1305 = vmatpush.msra.mxu0 0.0
        %1306 = vmatpush.msra.mxu0 0.0
        %1307 = vmatpush.msra.mxu0 0.0
        %1308 = vmatpush.msra.mxu0 0.0
        %1309 = vmatpush.msra.mxu0 0.0
        %1310 = vmatpush.msra.mxu0 0.0
        %1311 = vmatpush.msra.mxu0 0.0
        %1312 = vmatpush.msra.mxu0 0.0
        %1313 = vmatpush.msra.mxu0 0.0
        %1314 = vmatpush.msra.mxu0 %v1290
        %1315 = vmatpush.msra.mxu0 %v1289
        %1316 = vmatpush.msra.mxu0 %v1288
        %1317 = vmatpush.msra.mxu0 %v1287
        %1318 = vmatmul.f32.gmra.mxu0 %v1297
        %v1319 = vpop.f32.mrf.mxu0
        %v1320 = vadd.f32 %v1294, %v1319
        %1321 = vmatmul.f32.gmra.mxu0 %v1300
        %v1322 = vpop.f32.mrf.mxu0
        %v1323 = vadd.f32 %v1294, %v1322
        %1324 = vdwg.mxu0
        %1326 = vrot.lane.b32.xlu0 %v1320, 96
        %v1327 = vpop.permute.xlu0 %1326
        %v1328 = vsel %vm764, %v1320, 0
        %v1330 = vsel %vm764, %v1327, 0
        %1332 = vmatpush.xpose.msra.mxu0 0.0
        %1333 = vmatpush.xpose.msra.mxu0 0.0
        %1334 = vmatpush.xpose.msra.mxu0 0.0
        %1335 = vmatpush.xpose.msra.mxu0 0.0
        %1336 = vmatpush.xpose.msra.mxu0 0.0
        %1337 = vmatpush.xpose.msra.mxu0 0.0
        %1338 = vmatpush.xpose.msra.mxu0 0.0
        %1339 = vmatpush.xpose.msra.mxu0 0.0
        %1340 = vmatpush.xpose.msra.mxu0 0.0
        %1341 = vmatpush.xpose.msra.mxu0 0.0
        %1342 = vmatpush.xpose.msra.mxu0 0.0
        %1343 = vmatpush.xpose.msra.mxu0 0.0
        %1344 = vmatpush.xpose.msra.mxu0 0.0
        %1345 = vmatpush.xpose.msra.mxu0 0.0
        %1346 = vmatpush.xpose.msra.mxu0 0.0
        %1347 = vmatpush.xpose.msra.mxu0 %v1330
        %1348 = vmatmul.f32.gmra.mxu0 %v1328
        %v1349 = vpop.f32.mrf.mxu0
        %v1350 = vadd.f32 %v656, %v1349
        %1351 = vdwg.mxu0
        %1353 = vrot.lane.b32.xlu0 %v1323, 96
        %v1354 = vpop.permute.xlu0 %1353
        %v1355 = vsel %vm764, %v1323, 0
        %v1357 = vsel %vm764, %v1354, 0
        %1359 = vmatpush.xpose.msra.mxu0 0.0
        %1360 = vmatpush.xpose.msra.mxu0 0.0
        %1361 = vmatpush.xpose.msra.mxu0 0.0
        %1362 = vmatpush.xpose.msra.mxu0 0.0
        %1363 = vmatpush.xpose.msra.mxu0 0.0
        %1364 = vmatpush.xpose.msra.mxu0 0.0
        %1365 = vmatpush.xpose.msra.mxu0 0.0
        %1366 = vmatpush.xpose.msra.mxu0 0.0
        %1367 = vmatpush.xpose.msra.mxu0 0.0
        %1368 = vmatpush.xpose.msra.mxu0 0.0
        %1369 = vmatpush.xpose.msra.mxu0 0.0
        %1370 = vmatpush.xpose.msra.mxu0 0.0
        %1371 = vmatpush.xpose.msra.mxu0 0.0
        %1372 = vmatpush.xpose.msra.mxu0 0.0
        %1373 = vmatpush.xpose.msra.mxu0 0.0
        %1374 = vmatpush.xpose.msra.mxu0 %v1357
        %1375 = vmatmul.f32.gmra.mxu0 %v1355
        %v1376 = vpop.f32.mrf.mxu0
        %v1377 = vadd.f32 %v657, %v1376
        %1378 = vdwg.mxu0
        %v1379 = vsel %vm816, %v1350, -inf
        %1380 = vmax.xlane.f32.xlu0 %v1379
        %v1381 = vpop.xlane.xlu0 %1380
        %v1382 = vsel %vm816, %v1377, -inf
        %1383 = vmax.xlane.f32.xlu0 %v1382
        %v1384 = vpop.xlane.xlu0 %1383
        %v1385 = vsub.f32 %v1350, %v1381
        %v1386 = vsub.f32 %v1377, %v1384
        %v1387 = vmul.f32 %v1385, 1.442695
        %v1388 = vpow.pop %v1387
        %v1389 = vmul.f32 %v1386, 1.442695
        %v1390 = vpow.pop %v1389
        %v1391 = vsel %vm816, %v1388, 0.0
        %1392 = vadd.xlane.f32.xlu0 %v1391
        %v1393 = vpop.xlane.xlu0 %1392
        %v1394 = vsel %vm816, %v1390, 0.0
        %1395 = vadd.xlane.f32.xlu0 %v1394
        %v1396 = vpop.xlane.xlu0 %1395
        %v1397 = vrcp.pop %v1393
        %v1398 = vrcp.pop %v1396
        %v1399 = vmul.f32 %v1388, %v1397
        %v1400 = vmul.f32 %v1390, %v1398
        %1401 = vrot.lane.b32.xlu0 %v1320, 64
        %v1402 = vpop.permute.xlu0 %1401
        %v1405 = vsel %vm816, %v1399, 0
        %1407 = vmatpush.msra.mxu0 0.0
        %1408 = vmatpush.msra.mxu0 0.0
        %1409 = vmatpush.msra.mxu0 0.0
        %1410 = vmatpush.msra.mxu0 0.0
        %1411 = vmatpush.msra.mxu0 0.0
        %1412 = vmatpush.msra.mxu0 0.0
        %1413 = vmatpush.msra.mxu0 0.0
        %1414 = vmatpush.msra.mxu0 0.0
        %1415 = vmatpush.msra.mxu0 0.0
        %1416 = vmatpush.msra.mxu0 0.0
        %1417 = vmatpush.msra.mxu0 0.0
        %1418 = vmatpush.msra.mxu0 0.0
        %1419 = vmatpush.msra.mxu0 0.0
        %1420 = vmatpush.msra.mxu0 0.0
        %1421 = vmatpush.msra.mxu0 0.0
        %1422 = vmatpush.msra.mxu0 %v1402
        %1423 = vmatmul.f32.gmra.mxu0 %v1405
        %v1424 = vpop.f32.mrf.mxu0
        %v1425 = vadd.f32 0.0, %v1424
        %1426 = vdwg.mxu0
        %1427 = vrot.lane.b32.xlu0 %v1323, 64
        %v1428 = vpop.permute.xlu0 %1427
        %v1431 = vsel %vm816, %v1400, 0
        %1433 = vmatpush.msra.mxu0 0.0
        %1434 = vmatpush.msra.mxu0 0.0
        %1435 = vmatpush.msra.mxu0 0.0
        %1436 = vmatpush.msra.mxu0 0.0
        %1437 = vmatpush.msra.mxu0 0.0
        %1438 = vmatpush.msra.mxu0 0.0
        %1439 = vmatpush.msra.mxu0 0.0
        %1440 = vmatpush.msra.mxu0 0.0
        %1441 = vmatpush.msra.mxu0 0.0
        %1442 = vmatpush.msra.mxu0 0.0
        %1443 = vmatpush.msra.mxu0 0.0
        %1444 = vmatpush.msra.mxu0 0.0
        %1445 = vmatpush.msra.mxu0 0.0
        %1446 = vmatpush.msra.mxu0 0.0
        %1447 = vmatpush.msra.mxu0 0.0
        %1448 = vmatpush.msra.mxu0 %v1428
        %1449 = vmatmul.f32.gmra.mxu0 %v1431
        %v1450 = vpop.f32.mrf.mxu0
        %v1451 = vadd.f32 0.0, %v1450
        %1452 = vdwg.mxu0
        %1453 = vst.msk [vmem:[#allocation2] sm:$0xff] %vm764, %v1425
        %1454 = vst.msk [vmem:[#allocation2 + $0x8] sm:$0xff] %vm764, %v1451
        %1455 = vrot.lane.b32.xlu0 %v1320, 112
        %v1456 = vpop.permute.xlu0 %1455
        %1457 = vrot.lane.b32.xlu0 %v1320, 80
        %v1458 = vpop.permute.xlu0 %1457
        %v1459 = vsel %vm764, %v1456, 0
        %v1461 = vsel %vm764, %v1458, 0
        %1463 = vmatpush.xpose.msra.mxu0 0.0
        %1464 = vmatpush.xpose.msra.mxu0 0.0
        %1465 = vmatpush.xpose.msra.mxu0 0.0
        %1466 = vmatpush.xpose.msra.mxu0 0.0
        %1467 = vmatpush.xpose.msra.mxu0 0.0
        %1468 = vmatpush.xpose.msra.mxu0 0.0
        %1469 = vmatpush.xpose.msra.mxu0 0.0
        %1470 = vmatpush.xpose.msra.mxu0 0.0
        %1471 = vmatpush.xpose.msra.mxu0 0.0
        %1472 = vmatpush.xpose.msra.mxu0 0.0
        %1473 = vmatpush.xpose.msra.mxu0 0.0
        %1474 = vmatpush.xpose.msra.mxu0 0.0
        %1475 = vmatpush.xpose.msra.mxu0 0.0
        %1476 = vmatpush.xpose.msra.mxu0 0.0
        %1477 = vmatpush.xpose.msra.mxu0 0.0
        %1478 = vmatpush.xpose.msra.mxu0 %v1461
        %1479 = vmatmul.f32.gmra.mxu0 %v1459
        %v1480 = vpop.f32.mrf.mxu0
        %v1481 = vadd.f32 %v656, %v1480
        %1482 = vdwg.mxu0
        %1483 = vrot.lane.b32.xlu0 %v1323, 112
        %v1484 = vpop.permute.xlu0 %1483
        %1485 = vrot.lane.b32.xlu0 %v1323, 80
        %v1486 = vpop.permute.xlu0 %1485
        %v1487 = vsel %vm764, %v1484, 0
        %v1489 = vsel %vm764, %v1486, 0
        %1491 = vmatpush.xpose.msra.mxu0 0.0
        %1492 = vmatpush.xpose.msra.mxu0 0.0
        %1493 = vmatpush.xpose.msra.mxu0 0.0
        %1494 = vmatpush.xpose.msra.mxu0 0.0
        %1495 = vmatpush.xpose.msra.mxu0 0.0
        %1496 = vmatpush.xpose.msra.mxu0 0.0
        %1497 = vmatpush.xpose.msra.mxu0 0.0
        %1498 = vmatpush.xpose.msra.mxu0 0.0
        %1499 = vmatpush.xpose.msra.mxu0 0.0
        %1500 = vmatpush.xpose.msra.mxu0 0.0
        %1501 = vmatpush.xpose.msra.mxu0 0.0
        %1502 = vmatpush.xpose.msra.mxu0 0.0
        %1503 = vmatpush.xpose.msra.mxu0 0.0
        %1504 = vmatpush.xpose.msra.mxu0 0.0
        %1505 = vmatpush.xpose.msra.mxu0 0.0
        %1506 = vmatpush.xpose.msra.mxu0 %v1489
        %1507 = vmatmul.f32.gmra.mxu0 %v1487
        %v1508 = vpop.f32.mrf.mxu0
        %v1509 = vadd.f32 %v657, %v1508
        %1510 = vdwg.mxu0
        %v1511 = vsel %vm816, %v1481, -inf
        %1512 = vmax.xlane.f32.xlu0 %v1511
        %v1513 = vpop.xlane.xlu0 %1512
        %v1514 = vsel %vm816, %v1509, -inf
        %1515 = vmax.xlane.f32.xlu0 %v1514
        %v1516 = vpop.xlane.xlu0 %1515
        %v1517 = vsub.f32 %v1481, %v1513
        %v1518 = vsub.f32 %v1509, %v1516
        %v1519 = vmul.f32 %v1517, 1.442695
        %v1520 = vpow.pop %v1519
        %v1521 = vmul.f32 %v1518, 1.442695
        %v1522 = vpow.pop %v1521
        %v1523 = vsel %vm816, %v1520, 0.0
        %1524 = vadd.xlane.f32.xlu0 %v1523
        %v1525 = vpop.xlane.xlu0 %1524
        %v1526 = vsel %vm816, %v1522, 0.0
        %1527 = vadd.xlane.f32.xlu0 %v1526
        %v1528 = vpop.xlane.xlu0 %1527
        %v1529 = vrcp.pop %v1525
        %v1530 = vrcp.pop %v1528
        %v1531 = vmul.f32 %v1520, %v1529
        %v1532 = vmul.f32 %v1522, %v1530
        %1533 = vrot.lane.b32.xlu0 %v1320, 48
        %v1534 = vpop.permute.xlu0 %1533
        %v1537 = vsel %vm816, %v1531, 0
        %1539 = vmatpush.msra.mxu0 0.0
        %1540 = vmatpush.msra.mxu0 0.0
        %1541 = vmatpush.msra.mxu0 0.0
        %1542 = vmatpush.msra.mxu0 0.0
        %1543 = vmatpush.msra.mxu0 0.0
        %1544 = vmatpush.msra.mxu0 0.0
        %1545 = vmatpush.msra.mxu0 0.0
        %1546 = vmatpush.msra.mxu0 0.0
        %1547 = vmatpush.msra.mxu0 0.0
        %1548 = vmatpush.msra.mxu0 0.0
        %1549 = vmatpush.msra.mxu0 0.0
        %1550 = vmatpush.msra.mxu0 0.0
        %1551 = vmatpush.msra.mxu0 0.0
        %1552 = vmatpush.msra.mxu0 0.0
        %1553 = vmatpush.msra.mxu0 0.0
        %1554 = vmatpush.msra.mxu0 %v1534
        %1555 = vmatmul.f32.gmra.mxu0 %v1537
        %v1556 = vpop.f32.mrf.mxu0
        %v1557 = vadd.f32 0.0, %v1556
        %1558 = vdwg.mxu0
        %1559 = vrot.lane.b32.xlu0 %v1323, 48
        %v1560 = vpop.permute.xlu0 %1559
        %v1563 = vsel %vm816, %v1532, 0
        %1565 = vmatpush.msra.mxu0 0.0
        %1566 = vmatpush.msra.mxu0 0.0
        %1567 = vmatpush.msra.mxu0 0.0
        %1568 = vmatpush.msra.mxu0 0.0
        %1569 = vmatpush.msra.mxu0 0.0
        %1570 = vmatpush.msra.mxu0 0.0
        %1571 = vmatpush.msra.mxu0 0.0
        %1572 = vmatpush.msra.mxu0 0.0
        %1573 = vmatpush.msra.mxu0 0.0
        %1574 = vmatpush.msra.mxu0 0.0
        %1575 = vmatpush.msra.mxu0 0.0
        %1576 = vmatpush.msra.mxu0 0.0
        %1577 = vmatpush.msra.mxu0 0.0
        %1578 = vmatpush.msra.mxu0 0.0
        %1579 = vmatpush.msra.mxu0 0.0
        %1580 = vmatpush.msra.mxu0 %v1560
        %1581 = vmatmul.f32.gmra.mxu0 %v1563
        %v1582 = vpop.f32.mrf.mxu0
        %v1583 = vadd.f32 0.0, %v1582
        %1584 = vdwg.mxu0
        %1587 = vrot.lane.b32.xlu0 %v1557, 16
        %v1588 = vpop.permute.xlu0 %1587
        %1589 = vrot.lane.b32.xlu0 %v1583, 16
        %v1590 = vpop.permute.xlu0 %1589
        %1593 = vst.msk [vmem:[#allocation2] sm:$0xff] %vm1031, %v1588
        %1594 = vst.msk [vmem:[#allocation2 + $0x8] sm:$0xff] %vm1031, %v1590
        %v1595 = vld [vmem:[#allocation2] sm:$0xff]
        %v1596 = vld [vmem:[#allocation2 + $0x8] sm:$0xff]
        %s1597 = scalar_lea.vmem %s6, 32
        %v1598 = vld [vmem:[%s1597] sm:$0xff]
        %v1599 = vld [vmem:[%s1597 + $0x8] sm:$0xff]
        %v1600 = vld [vmem:[%s1597 + $0x10] sm:$0xff]
        %v1601 = vld [vmem:[%s1597 + $0x18] sm:$0xff]
        %s1602 = scalar_lea.vmem %s7, 1
        %v1603 = vld [vmem:[%s1602] sm:$0x1]
        %v1605 = vperm.slane %v1603, 0
        %v1608 = vsel %vm662, %v1595, 0
        %v1611 = vsel %vm662, %v1596, 0
        %1613 = vmatpush.msra.mxu0 0.0
        %1614 = vmatpush.msra.mxu0 0.0
        %1615 = vmatpush.msra.mxu0 0.0
        %1616 = vmatpush.msra.mxu0 0.0
        %1617 = vmatpush.msra.mxu0 0.0
        %1618 = vmatpush.msra.mxu0 0.0
        %1619 = vmatpush.msra.mxu0 0.0
        %1620 = vmatpush.msra.mxu0 0.0
        %1621 = vmatpush.msra.mxu0 0.0
        %1622 = vmatpush.msra.mxu0 0.0
        %1623 = vmatpush.msra.mxu0 0.0
        %1624 = vmatpush.msra.mxu0 0.0
        %1625 = vmatpush.msra.mxu0 %v1601
        %1626 = vmatpush.msra.mxu0 %v1600
        %1627 = vmatpush.msra.mxu0 %v1599
        %1628 = vmatpush.msra.mxu0 %v1598
        %1629 = vmatmul.f32.gmra.mxu0 %v1608
        %v1630 = vpop.f32.mrf.mxu0
        %v1631 = vadd.f32 %v1605, %v1630
        %1632 = vmatmul.f32.gmra.mxu0 %v1611
        %v1633 = vpop.f32.mrf.mxu0
        %v1634 = vadd.f32 %v1605, %v1633
        %1635 = vdwg.mxu0
        %v1636 = vadd.f32 %v1284, %v1631
        %v1637 = vadd.f32 %v1285, %v1634
        %s1638 = scalar_lea.vmem %s8, 1
        %v1639 = vld [vmem:[%s1638] sm:$0x1]
        %s1640 = scalar_lea.vmem %s9, 1
        %v1641 = vld [vmem:[%s1640] sm:$0x1]
        %v1642 = vsel %vm662, %v1636, 0.0
        %1643 = vadd.xlane.f32.xlu0 %v1642
        %v1644 = vpop.xlane.xlu0 %1643
        %v1645 = vsel %vm662, %v1637, 0.0
        %1646 = vadd.xlane.f32.xlu0 %v1645
        %v1647 = vpop.xlane.xlu0 %1646
        %v1648 = vmul.f32 %v1644, %v675
        %v1649 = vmul.f32 %v1647, %v675
        %v1650 = vsub.f32 %v1636, %v1648
        %v1651 = vsub.f32 %v1637, %v1649
        %v1652 = vmul.f32 %v1650, %v1650
        %v1653 = vmul.f32 %v1651, %v1651
        %v1654 = vsel %vm662, %v1652, 0.0
        %1655 = vadd.xlane.f32.xlu0 %v1654
        %v1656 = vpop.xlane.xlu0 %1655
        %v1657 = vsel %vm662, %v1653, 0.0
        %1658 = vadd.xlane.f32.xlu0 %v1657
        %v1659 = vpop.xlane.xlu0 %1658
        %v1660 = vmul.f32 %v1656, %v675
        %v1661 = vmul.f32 %v1659, %v675
        %v1662 = vadd.f32 %v1660, 1e-12
        %v1663 = vadd.f32 %v1661, 1e-12
        %v1664 = vrsqrt.pop %v1662
        %v1665 = vmul.f32 %v1664, %v1662
        %v1666 = vmul.f32 %v1665, %v1664
        %v1667 = vmul.f32 0.5, %v1666
        %v1668 = vsub.f32 1.5, %v1667
        %v1669 = vmul.f32 %v1664, %v1668
        %vm1670 = vweird.f32 %v1662
        %vm1671 = vweird.f32 %v1664
        %vm1672 = vmor %vm1670, %vm1671
        %v1673 = vsel %vm1672, %v1664, %v1669
        %v1674 = vrsqrt.pop %v1663
        %v1675 = vmul.f32 %v1674, %v1663
        %v1676 = vmul.f32 %v1675, %v1674
        %v1677 = vmul.f32 0.5, %v1676
        %v1678 = vsub.f32 1.5, %v1677
        %v1679 = vmul.f32 %v1674, %v1678
        %vm1680 = vweird.f32 %v1663
        %vm1681 = vweird.f32 %v1674
        %vm1682 = vmor %vm1680, %vm1681
        %v1683 = vsel %vm1682, %v1674, %v1679
        %v1684 = vmul.f32 %v1650, %v1673
        %v1685 = vmul.f32 %v1651, %v1683
        %v1687 = vperm.slane %v1639, 0
        %v1689 = vmul.f32 %v1684, %v1687
        %v1690 = vmul.f32 %v1685, %v1687
        %v1692 = vperm.slane %v1641, 0
        %v1694 = vadd.f32 %v1689, %v1692
        %v1695 = vadd.f32 %v1690, %v1692
        %s1696 = scalar_lea.vmem %s10, 32
        %v1697 = vld [vmem:[%s1696] sm:$0xff]
        %v1698 = vld [vmem:[%s1696 + $0x8] sm:$0xff]
        %v1699 = vld [vmem:[%s1696 + $0x10] sm:$0xff]
        %v1700 = vld [vmem:[%s1696 + $0x18] sm:$0xff]
        %s1701 = scalar_lea.vmem %s11, 1
        %v1702 = vld [vmem:[%s1701] sm:$0x1]
        %v1704 = vperm.slane %v1702, 0
        %v1707 = vsel %vm662, %v1694, 0
        %v1710 = vsel %vm662, %v1695, 0
        %1712 = vmatpush.msra.mxu0 0.0
        %1713 = vmatpush.msra.mxu0 0.0
        %1714 = vmatpush.msra.mxu0 0.0
        %1715 = vmatpush.msra.mxu0 0.0
        %1716 = vmatpush.msra.mxu0 0.0
        %1717 = vmatpush.msra.mxu0 0.0
        %1718 = vmatpush.msra.mxu0 0.0
        %1719 = vmatpush.msra.mxu0 0.0
        %1720 = vmatpush.msra.mxu0 0.0
        %1721 = vmatpush.msra.mxu0 0.0
        %1722 = vmatpush.msra.mxu0 0.0
        %1723 = vmatpush.msra.mxu0 0.0
        %1724 = vmatpush.msra.mxu0 %v1700
        %1725 = vmatpush.msra.mxu0 %v1699
        %1726 = vmatpush.msra.mxu0 %v1698
        %1727 = vmatpush.msra.mxu0 %v1697
        %1728 = vmatmul.f32.gmra.mxu0 %v1707
        %v1729 = vpop.f32.mrf.mxu0
        %v1730 = vadd.f32 %v1704, %v1729
        %1731 = vmatmul.f32.gmra.mxu0 %v1710
        %v1732 = vpop.f32.mrf.mxu0
        %v1733 = vadd.f32 %v1704, %v1732
        %1734 = vdwg.mxu0
        %v1735 = vmul.f32 %v1730, %v1730
        %v1736 = vmul.f32 %v1733, %v1733
        %v1737 = vmul.f32 %v1730, %v1735
        %v1738 = vmul.f32 %v1733, %v1736
        %v1739 = vmul.f32 %v1737, 0.044715
        %v1740 = vmul.f32 %v1738, 0.044715
        %v1741 = vadd.f32 %v1730, %v1739
        %v1742 = vadd.f32 %v1733, %v1740
        %v1743 = vmul.f32 %v1741, 0.7978846
        %v1744 = vmul.f32 %v1742, 0.7978846
        %v1745 = vtanh.pop %v1743
        %v1746 = vtanh.pop %v1744
        %v1747 = vadd.f32 %v1745, 1.0
        %v1748 = vadd.f32 %v1746, 1.0
        %v1749 = vmul.f32 %v1747, 0.5
        %v1750 = vmul.f32 %v1748, 0.5
        %v1751 = vmul.f32 %v1730, %v1749
        %v1752 = vmul.f32 %v1733, %v1750
        %s1753 = scalar_lea.vmem %s12, 64
        %v1754 = vld [vmem:[%s1753] sm:$0xff]
        %v1755 = vld [vmem:[%s1753 + $0x8] sm:$0xff]
        %v1756 = vld [vmem:[%s1753 + $0x10] sm:$0xff]
        %v1757 = vld [vmem:[%s1753 + $0x18] sm:$0xff]
        %v1758 = vld [vmem:[%s1753 + $0x20] sm:$0xff]
        %v1759 = vld [vmem:[%s1753 + $0x28] sm:$0xff]
        %v1760 = vld [vmem:[%s1753 + $0x30] sm:$0xff]
        %v1761 = vld [vmem:[%s1753 + $0x38] sm:$0xff]
        %s1762 = scalar_lea.vmem %s13, 1
        %v1763 = vld [vmem:[%s1762] sm:$0x1]
        %v1765 = vperm.slane %v1763, 0
        %v1768 = vsel %vm1198, %v1751, 0
        %v1771 = vsel %vm1198, %v1752, 0
        %1773 = vmatpush.msra.mxu0 0.0
        %1774 = vmatpush.msra.mxu0 0.0
        %1775 = vmatpush.msra.mxu0 0.0
        %1776 = vmatpush.msra.mxu0 0.0
        %1777 = vmatpush.msra.mxu0 0.0
        %1778 = vmatpush.msra.mxu0 0.0
        %1779 = vmatpush.msra.mxu0 0.0
        %1780 = vmatpush.msra.mxu0 0.0
        %1781 = vmatpush.msra.mxu0 %v1761
        %1782 = vmatpush.msra.mxu0 %v1760
        %1783 = vmatpush.msra.mxu0 %v1759
        %1784 = vmatpush.msra.mxu0 %v1758
        %1785 = vmatpush.msra.mxu0 %v1757
        %1786 = vmatpush.msra.mxu0 %v1756
        %1787 = vmatpush.msra.mxu0 %v1755
        %1788 = vmatpush.msra.mxu0 %v1754
        %1789 = vmatmul.f32.gmra.mxu0 %v1768
        %v1790 = vpop.f32.mrf.mxu0
        %v1791 = vadd.f32 %v1765, %v1790
        %1792 = vmatmul.f32.gmra.mxu0 %v1771
        %v1793 = vpop.f32.mrf.mxu0
        %v1794 = vadd.f32 %v1765, %v1793
        %1795 = vdwg.mxu0
        %v1796 = vadd.f32 %v1694, %v1791
        %v1797 = vadd.f32 %v1695, %v1794
        %s1798 = scalar_lea.vmem %s14, 1
        %v1799 = vld [vmem:[%s1798] sm:$0x1]
        %s1800 = scalar_lea.vmem %s15, 1
        %v1801 = vld [vmem:[%s1800] sm:$0x1]
        %v1802 = vsel %vm662, %v1796, 0.0
        %1803 = vadd.xlane.f32.xlu0 %v1802
        %v1804 = vpop.xlane.xlu0 %1803
        %v1805 = vsel %vm662, %v1797, 0.0
        %1806 = vadd.xlane.f32.xlu0 %v1805
        %v1807 = vpop.xlane.xlu0 %1806
        %v1808 = vmul.f32 %v1804, %v675
        %v1809 = vmul.f32 %v1807, %v675
        %v1810 = vsub.f32 %v1796, %v1808
        %v1811 = vsub.f32 %v1797, %v1809
        %v1812 = vmul.f32 %v1810, %v1810
        %v1813 = vmul.f32 %v1811, %v1811
        %v1814 = vsel %vm662, %v1812, 0.0
        %1815 = vadd.xlane.f32.xlu0 %v1814
        %v1816 = vpop.xlane.xlu0 %1815
        %v1817 = vsel %vm662, %v1813, 0.0
        %1818 = vadd.xlane.f32.xlu0 %v1817
        %v1819 = vpop.xlane.xlu0 %1818
        %v1820 = vmul.f32 %v1816, %v675
        %v1821 = vmul.f32 %v1819, %v675
        %v1822 = vadd.f32 %v1820, 1e-12
        %v1823 = vadd.f32 %v1821, 1e-12
        %v1824 = vrsqrt.pop %v1822
        %v1825 = vmul.f32 %v1824, %v1822
        %v1826 = vmul.f32 %v1825, %v1824
        %v1827 = vmul.f32 0.5, %v1826
        %v1828 = vsub.f32 1.5, %v1827
        %v1829 = vmul.f32 %v1824, %v1828
        %vm1830 = vweird.f32 %v1822
        %vm1831 = vweird.f32 %v1824
        %vm1832 = vmor %vm1830, %vm1831
        %v1833 = vsel %vm1832, %v1824, %v1829
        %v1834 = vrsqrt.pop %v1823
        %v1835 = vmul.f32 %v1834, %v1823
        %v1836 = vmul.f32 %v1835, %v1834
        %v1837 = vmul.f32 0.5, %v1836
        %v1838 = vsub.f32 1.5, %v1837
        %v1839 = vmul.f32 %v1834, %v1838
        %vm1840 = vweird.f32 %v1823
        %vm1841 = vweird.f32 %v1834
        %vm1842 = vmor %vm1840, %vm1841
        %v1843 = vsel %vm1842, %v1834, %v1839
        %v1844 = vmul.f32 %v1810, %v1833
        %v1845 = vmul.f32 %v1811, %v1843
        %v1847 = vperm.slane %v1799, 0
        %v1849 = vmul.f32 %v1844, %v1847
        %v1850 = vmul.f32 %v1845, %v1847
        %v1852 = vperm.slane %v1801, 0
        %v1854 = vadd.f32 %v1849, %v1852
        %v1855 = vadd.f32 %v1850, %v1852
        %v1856 = vld [vmem:[%s16] sm:$0xff]
        %v1857 = vld [vmem:[%s16 + $0x8] sm:$0xff]
        %v1858 = vld [vmem:[%s16 + $0x10] sm:$0xff]
        %v1859 = vld [vmem:[%s16 + $0x18] sm:$0xff]
        %v1860 = vld [vmem:[%s17] sm:$0x1]
        %v1863 = vrot.slane %v1855, 7
        %vm1864 = vcmask 1041409
        %v1865 = vsel %vm1864, %v1863, %v1854
        %1867 = vst [vmem:[#allocation1] ss:$9 sm:$0xff] %v1860
        %s1868 = scalar_lea.vmem [#allocation1], 1
        %1869 = vst [vmem:[%s1868] ss:$9 sm:$0xff] %v1860
        %v1870 = vld [vmem:[#allocation1] sm:$0xff]
        %v1872 = vsel %vm662, %v1865, 0
        %1874 = vmatpush.msra.mxu0 0.0
        %1875 = vmatpush.msra.mxu0 0.0
        %1876 = vmatpush.msra.mxu0 0.0
        %1877 = vmatpush.msra.mxu0 0.0
        %1878 = vmatpush.msra.mxu0 0.0
        %1879 = vmatpush.msra.mxu0 0.0
        %1880 = vmatpush.msra.mxu0 0.0
        %1881 = vmatpush.msra.mxu0 0.0
        %1882 = vmatpush.msra.mxu0 0.0
        %1883 = vmatpush.msra.mxu0 0.0
        %1884 = vmatpush.msra.mxu0 0.0
        %1885 = vmatpush.msra.mxu0 0.0
        %1886 = vmatpush.msra.mxu0 %v1859
        %1887 = vmatpush.msra.mxu0 %v1858
        %1888 = vmatpush.msra.mxu0 %v1857
        %1889 = vmatpush.msra.mxu0 %v1856
        %1890 = vmatmul.f32.gmra.mxu0 %v1872
        %v1891 = vpop.f32.mrf.mxu0
        %v1892 = vadd.f32 %v1870, %v1891
        %1893 = vdwg.mxu0
        %v1895 = vrot.slane %v1892, 1
        %v1897 = vtanh.pop %v1892
        %v1898 = vtanh.pop %v1895
        %v1899 = vld [vmem:[%s18] sm:$0xff]
        %v1900 = vld [vmem:[%s18 + $0x8] sm:$0xff]
        %v1901 = vld [vmem:[%s18 + $0x10] sm:$0xff]
        %v1902 = vld [vmem:[%s18 + $0x18] sm:$0xff]
        %v1903 = vld [vmem:[%s19] sm:$0x1]
        %1906 = vst [vmem:[#allocation1] ss:$9 sm:$0xff] %v1897
        %s1907 = scalar_lea.vmem [#allocation1], 1
        %1908 = vst [vmem:[%s1907] ss:$9 sm:$0xff] %v1898
        %v1909 = vld [vmem:[#allocation1] sm:$0xff]
        %1911 = vst [vmem:[#allocation1] ss:$9 sm:$0xff] %v1903
        %s1912 = scalar_lea.vmem [#allocation1], 1
        %1913 = vst [vmem:[%s1912] ss:$9 sm:$0xff] %v1903
        %v1914 = vld [vmem:[#allocation1] sm:$0xff]
        %v1916 = vsel %vm662, %v1909, 0
        %1918 = vmatpush.msra.mxu0 0.0
        %1919 = vmatpush.msra.mxu0 0.0
        %1920 = vmatpush.msra.mxu0 0.0
        %1921 = vmatpush.msra.mxu0 0.0
        %1922 = vmatpush.msra.mxu0 0.0
        %1923 = vmatpush.msra.mxu0 0.0
        %1924 = vmatpush.msra.mxu0 0.0
        %1925 = vmatpush.msra.mxu0 0.0
        %1926 = vmatpush.msra.mxu0 0.0
        %1927 = vmatpush.msra.mxu0 0.0
        %1928 = vmatpush.msra.mxu0 0.0
        %1929 = vmatpush.msra.mxu0 0.0
        %1930 = vmatpush.msra.mxu0 %v1902
        %1931 = vmatpush.msra.mxu0 %v1901
        %1932 = vmatpush.msra.mxu0 %v1900
        %1933 = vmatpush.msra.mxu0 %v1899
        %1934 = vmatmul.f32.gmra.mxu0 %v1916
        %v1935 = vpop.f32.mrf.mxu0
        %v1936 = vadd.f32 %v1914, %v1935
        %1937 = vdwg.mxu0
        %v1939 = vrot.slane %v1936, 1
        %1941 = vst [vmem:[%s637] sm:$0x1] %v1936
        %1942 = vst [vmem:[%s637 + $0x1] sm:$0x1] %v1939
        %s1943 = sand.u32 %s472, 1
        %s1944 = scalar_lea.sflag [#allocation4], %s1943
        %s1945 = sand.u32 %s472, 1
        %s1946 = smul.addr %s1945, 2
        %s1947 = scalar_lea.vmem [#allocation3], %s1946
        // Predicated region
        $region101: #{big_model_forward.1} parent=99 // pred_check
          %p1948 = pneg %p482
        $region102: #{big_model_forward.1} parent=99 // pred_check_branch
          %1950 = sbr.rel (%p1948) target = $region104
        $region103: #{big_model_forward.1} parent=99 // pred_region
          %s1951 = smul.u32 2, %s34
          %1953 = vsyncadd %s1944, 0
          %s1954 = scalar_lea.hbm %s20, %s1951
          %s1955 = sshll.u32 %s1947, 4
          %s1956 = int_to_ptr.vmem [resolvable:$true] %s1955
          %s1957 = sshll.u32 %s1954, 4
          %s1958 = int_to_ptr.hbm [resolvable:$true] %s1957
          %1963 = dma.vmem_to_hbm [thread:$0]  %s1956, 32, %s1958, %s1944, 16, 16, 1
        $region104: #{big_model_forward.1} parent=99 // pred_fallthru
          _
      $region100: #{big_model_forward.1} parent=5 // pred_fallthru
        _
      %p1964 = scmp.le.s32.totalorder 2, %s29
      // Predicated region
      $region105: #{big_model_forward.1} parent=5 // pred_check
        %p1965 = pneg %p1964
      $region106: #{big_model_forward.1} parent=5 // pred_check_branch
        %1967 = sbr.rel (%p1965) target = $region108
      $region107: #{big_model_forward.1} parent=5 // pred_region
        %s1968 = ssub.s32 %s29, 2
        // Predicated region
        $region109: #{big_model_forward.1} parent=107 // pred_check
          %p1969 = pneg %p488
        $region110: #{big_model_forward.1} parent=107 // pred_check_branch
          %1971 = sbr.rel (%p1969) target = $region112
        $region111: #{big_model_forward.1} parent=107 // pred_region
          %s1972 = sand.u32 %s473, 1
          %s1973 = scalar_lea.sflag [#allocation4], %s1972
          %s1974 = sand.u32 %s473, 1
          %s1975 = smul.addr %s1974, 2
          %s1976 = scalar_lea.vmem [#allocation3], %s1975
          %1978 = dma.done %s1973, 32
        $region112: #{big_model_forward.1} parent=107 // pred_fallthru
          _
      $region108: #{big_model_forward.1} parent=5 // pred_fallthru
        _
    $region6: #{big_model_forward.1} parent=1 // loop_footer
      %s33 = sadd.s32 1, %s29
    $region7: #{big_model_forward.1} parent=1 // loop_footer_branch
      %28 = sbr.rel target = $region3
    $region8: #{big_model_forward.1} parent=1 // loop_exit
      _
    %1979 = vsyncpa [#allocation4], 1
    %s1980 = scalar_lea.sflag [#allocation4], 1
    %1981 = vsyncpa %s1980, 1

</llo_original>
